<compile_context>
chip_gen: v5e
topology: v5e:2x2
jax: 0.10.0
libtpu: 0.0.40
codegen_flags: <defaults>
</compile_context>

<pallas_src>
import jax
import jax.numpy as jnp
from jax.experimental import pallas as pl
from jax.experimental.pallas import tpu as pltpu

LANE = 128  # pad every output channel dim to this (lane-dense stores)


def _round_up(n, m):
    return ((n + m - 1) // m) * m


def _pad_last(a, to):
    pad = to - a.shape[-1]
    if pad > 0:
        a = jnp.pad(a, [(0, 0)] * (a.ndim - 1) + [(0, pad)])
    return a


# ----------------------------------------------------------------------------
# Pallas kernels
# ----------------------------------------------------------------------------
def _conv_pool_relu_kernel(x_ref, w_ref, b_ref, o_ref):
    """Fused valid-conv (im2col matmul) + bias + 2x2/stride-2 maxpool + ReLU.

    x_ref : (4, T, Cin*K*K) bf16  -- im2col patches for the 4 pool offsets
    w_ref : (Cin*K*K, 128)  bf16  -- conv weight, Cout zero-padded to 128
    b_ref : (1, 128)        f32   -- bias, zero-padded
    o_ref : (T, 128)        bf16  -- ReLU(maxpool(conv)) for T pooled positions
    """
    t = x_ref.shape[1]
    x = x_ref[...].reshape(4 * t, x_ref.shape[2])          # merge offset axis
    # One long MXU stream instead of 4 short pushes; f32 accumulation.
    y = jnp.dot(x, w_ref[...], preferred_element_type=jnp.float32)  # (4T, 128)
    pooled = jnp.maximum(jnp.maximum(y[0 * t:1 * t], y[1 * t:2 * t]),
                         jnp.maximum(y[2 * t:3 * t], y[3 * t:4 * t]))
    # Per-channel bias commutes with the max over the 4 window taps.
    pooled = pooled + b_ref[...]
    o_ref[...] = jnp.maximum(pooled, 0.0).astype(o_ref.dtype)


def _mlp_kernel(x_ref, w1_ref, b1_ref, w2_ref, b2_ref, logits_ref, e1_ref):
    """Fused fc1 + ReLU + fc2.

    x_ref : (T, 320) bf16         w1_ref: (320, 128) bf16   b1_ref: (1, 128) f32
    w2_ref: (128, 128) bf16       b2_ref: (1, 128) f32
    logits_ref / e1_ref : (T, 128) f32
    """
    h = jnp.dot(x_ref[...], w1_ref[...], preferred_element_type=jnp.float32)
    h = jnp.maximum(h + b1_ref[...], 0.0)                  # (T, 128) f32
    e1_ref[...] = h
    # TODO(synk): F.dropout(e1) is an inference-mode identity (no RNG mask).
    y = jnp.dot(h.astype(w2_ref.dtype), w2_ref[...],
                preferred_element_type=jnp.float32)
    logits_ref[...] = y + b2_ref[...]


# ----------------------------------------------------------------------------
# pallas_call wrappers (row-tiled grid, lane-padded Cout)
# ----------------------------------------------------------------------------
def conv_pool_relu(cols, w_pad, b_pad, cout, *, row_tile=256):
    """cols: (4, N, Kdim) bf16.  Returns (N, cout) bf16."""
    _, n, kdim = cols.shape
    cout_p = w_pad.shape[1]
    t = min(row_tile, _round_up(n, 16))                    # multiple of 16 (bf16)
    n_pad = _round_up(n, t)
    if n_pad != n:
        cols = jnp.pad(cols, ((0, 0), (0, n_pad - n), (0, 0)))

    out = pl.pallas_call(
        _conv_pool_relu_kernel,
        out_shape=jax.ShapeDtypeStruct((n_pad, cout_p), jnp.bfloat16),
        grid_spec=pltpu.PrefetchScalarGridSpec(
            num_scalar_prefetch=0,
            grid=(n_pad // t,),
            in_specs=[
                pl.BlockSpec((4, t, kdim), lambda i: (0, i, 0)),
                pl.BlockSpec((kdim, cout_p), lambda i: (0, 0)),   # VMEM resident
                pl.BlockSpec((1, cout_p), lambda i: (0, 0)),
            ],
            out_specs=pl.BlockSpec((t, cout_p), lambda i: (i, 0)),
        ),
        compiler_params=pltpu.CompilerParams(
            dimension_semantics=("parallel",)),
    )(cols, w_pad, b_pad)
    return out[:n, :cout]


def mlp_head(x, w1_pad, b1_pad, w2_pad, b2_pad, *, row_tile=256):
    """x: (B, 320) bf16. Returns (logits (B,10) f32, e1 (B,50) f32)."""
    n, fin = x.shape
    t = min(row_tile, _round_up(n, 16))
    n_pad = _round_up(n, t)
    if n_pad != n:
        x = jnp.pad(x, ((0, n_pad - n), (0, 0)))

    logits, e1 = pl.pallas_call(
        _mlp_kernel,
        out_shape=(jax.ShapeDtypeStruct((n_pad, LANE), jnp.float32),
                   jax.ShapeDtypeStruct((n_pad, LANE), jnp.float32)),
        grid_spec=pltpu.PrefetchScalarGridSpec(
            num_scalar_prefetch=0,
            grid=(n_pad // t,),
            in_specs=[
                pl.BlockSpec((t, fin), lambda i: (i, 0)),
                pl.BlockSpec((fin, LANE), lambda i: (0, 0)),
                pl.BlockSpec((1, LANE), lambda i: (0, 0)),
                pl.BlockSpec((LANE, LANE), lambda i: (0, 0)),
                pl.BlockSpec((1, LANE), lambda i: (0, 0)),
            ],
            out_specs=[pl.BlockSpec((t, LANE), lambda i: (i, 0)),
                       pl.BlockSpec((t, LANE), lambda i: (i, 0))],
        ),
        compiler_params=pltpu.CompilerParams(
            dimension_semantics=("parallel",)),
    )(x, w1_pad, b1_pad, w2_pad, b2_pad)
    return logits[:n, :10], e1[:n, :50]


# ----------------------------------------------------------------------------
# JAX glue: im2col grouped by the four 2x2-maxpool offsets
# ----------------------------------------------------------------------------
# TODO(synk): im2col patch extraction stays in XLA glue; forming the K*K taps
# in-kernel (strided spatial gathers) has no clean/portable Pallas lowering at
# these tiny channel counts.
def _im2col_pool_offsets(x_nhwc, k):
    """Returns (4, B*Hp*Wp, Cin*k*k) patches (offset-stacked), feature order
    (Cin, kh, kw) matching torch Conv2d weight flattening."""
    b, h, w, cin = x_nhwc.shape
    ho, wo = h - k + 1, w - k + 1     # valid conv output
    hp, wp = ho // 2, wo // 2         # after 2x2 / stride-2 max-pool
    offs = []
    for oi in range(2):
        for oj in range(2):
            taps = []
            for kh in range(k):
                for kw in range(k):
                    sl = x_nhwc[:, oi + kh: oi + kh + 2 * hp: 2,
                                   oj + kw: oj + kw + 2 * wp: 2, :]  # (B,Hp,Wp,Cin)
                    taps.append(sl)
            p = jnp.stack(taps, axis=-1)                  # (B,Hp,Wp,Cin,k*k)
            offs.append(p.reshape(b * hp * wp, cin * k * k))
    return jnp.stack(offs, axis=0), (hp, wp)              # (4, N, Cin*k*k)


def _conv_w(w):   # (Cout, Cin, k, k) -> (Cin*k*k, 128) bf16, Cout zero-padded
    wm = w.reshape(w.shape[0], -1).T
    return _pad_last(wm, LANE).astype(jnp.bfloat16)


def _bias_row(bias):  # (Cout,) -> (1, 128) f32, zero-padded
    return _pad_last(bias.reshape(1, -1), LANE).astype(jnp.float32)


# ----------------------------------------------------------------------------
# Net1 forward
# ----------------------------------------------------------------------------
def net1_forward(params, x_nchw):
    b = x_nchw.shape[0]
    x = jnp.transpose(x_nchw, (0, 2, 3, 1)).astype(jnp.bfloat16)  # NCHW->NHWC bf16

    # --- conv1 (1->10, k=5) + maxpool(2) + relu (one fused kernel) ---
    cols, (hp, wp) = _im2col_pool_offsets(x, 5)                   # (4, B*144, 25)
    y1 = conv_pool_relu(cols, _conv_w(params["conv1_w"]),
                        _bias_row(params["conv1_b"]), cout=10)
    x = y1.reshape(b, hp, wp, 10)                                 # (B, 12, 12, 10)

    # --- conv2 (10->20, k=5) [Dropout2d: identity in eval] + maxpool + relu ---
    # TODO(synk): nn.Dropout2d is an inference-mode identity (no RNG mask).
    cols, (hp, wp) = _im2col_pool_offsets(x, 5)                   # (4, B*16, 250)
    y2 = conv_pool_relu(cols, _conv_w(params["conv2_w"]),
                        _bias_row(params["conv2_b"]), cout=20)
    x = y2.reshape(b, hp, wp, 20)                                 # (B, 4, 4, 20)

    # --- flatten + fc1(+ReLU) + fc2, fused in one kernel ---
    # Fold the NHWC->NCHW flatten permutation into fc1's weight instead of
    # transposing the activation:  torch flattens (C,H,W); we flatten (H,W,C).
    x_flat = x.reshape(b, hp * wp * 20).astype(jnp.bfloat16)      # (B, 320)
    w_fc1 = params["fc1_w"].reshape(50, 20, hp, wp)               # (out, c, h, w)
    w_fc1 = jnp.transpose(w_fc1, (0, 2, 3, 1)).reshape(50, 320).T # (320, 50) h,w,c rows
    w1_pad = _pad_last(w_fc1, LANE).astype(jnp.bfloat16)          # (320, 128)
    b1_pad = _bias_row(params["fc1_b"])                           # (1, 128)

    w_fc2 = params["fc2_w"].T                                     # (50, 10)
    w2_pad = jnp.pad(w_fc2, ((0, LANE - 50), (0, LANE - 10))
                     ).astype(jnp.bfloat16)                       # (128, 128)
    b2_pad = _bias_row(params["fc2_b"])                           # (1, 128)

    logits, e1 = mlp_head(x_flat, w1_pad, b1_pad, w2_pad, b2_pad)
    return logits, e1


# ----------------------------------------------------------------------------
# Deterministic parameter init (torch-like fan_in-scaled uniform)
# ----------------------------------------------------------------------------
def init_params(key):
    def init(k, shape, fan_in):
        kw, kb = jax.random.split(k)
        s = float(1.0 / (fan_in ** 0.5))
        w = jax.random.uniform(kw, shape, jnp.float32, -s, s)
        bias = jax.random.uniform(kb, (shape[0],), jnp.float32, -s, s)
        return w, bias

    k1, k2, k3, k4 = jax.random.split(key, 4)
    c1w, c1b = init(k1, (10, 1, 5, 5), 1 * 5 * 5)
    c2w, c2b = init(k2, (20, 10, 5, 5), 10 * 5 * 5)
    f1w, f1b = init(k3, (50, 320), 320)
    f2w, f2b = init(k4, (10, 50), 50)
    return {
        "conv1_w": c1w, "conv1_b": c1b,
        "conv2_w": c2w, "conv2_b": c2b,
        "fc1_w": f1w, "fc1_b": f1b,
        "fc2_w": f2w, "fc2_b": f2b,
    }


if __name__ == "__main__":
    key = jax.random.PRNGKey(0)
    kx, kp = jax.random.split(key)
    params = init_params(kp)

    # 28x28 single-channel input is implied by fc1's 320 = 20*4*4 features.
    x = jax.random.normal(kx, (2, 1, 28, 28), jnp.float32)

    fwd = jax.jit(net1_forward)
    logits, e1 = fwd(params, x)
    jax.block_until_ready((logits, e1))

    assert logits.shape == (2, 10) and logits.dtype == jnp.float32
    assert e1.shape == (2, 50) and e1.dtype == jnp.float32
    assert bool(jnp.all(e1 >= 0.0))            # e1 is post-ReLU
    assert bool(jnp.all(jnp.isfinite(logits)))
    print("KERNEL_OK")
</pallas_src>

<mosaic_0001>
module attributes {stable_mosaic.version = 11 : i64} {
  func.func @_conv_pool_relu_kernel(%arg0: i32, %arg1: memref<4x256x25xbf16, #tpu.memory_space<vmem>>, %arg2: memref<25x128xbf16, #tpu.memory_space<vmem>>, %arg3: memref<1x128xf32, #tpu.memory_space<vmem>>, %arg4: memref<256x128xbf16, #tpu.memory_space<vmem>>) attributes {dimension_semantics = [#tpu.dimension_semantics<parallel>], iteration_bounds = array<i64: 2>, scalar_prefetch = 0 : i64, scratch_operands = 0 : i64, tpu.core_type = #tpu.core_type<tc>, window_params = [{transform_indices = @transform_0, window_bounds = array<i64: 4, 256, 25>}, {pipeline_mode = #tpu.pipeline_mode<synchronous>, transform_indices = @transform_1, window_bounds = array<i64: 25, 128>}, {pipeline_mode = #tpu.pipeline_mode<synchronous>, transform_indices = @transform_2, window_bounds = array<i64: 1, 128>}, {transform_indices = @transform_3, window_bounds = array<i64: 256, 128>}]} {
    %c0 = arith.constant 0 : index
    %c0_0 = arith.constant 0 : index
    %c0_1 = arith.constant 0 : index
    %0 = vector.load %arg1[%c0, %c0_0, %c0_1] : memref<4x256x25xbf16, #tpu.memory_space<vmem>>, vector<4x256x25xbf16>
    %1 = vector.shape_cast %0 : vector<4x256x25xbf16> to vector<1024x25xbf16>
    %c0_2 = arith.constant 0 : index
    %c0_3 = arith.constant 0 : index
    %2 = vector.load %arg2[%c0_2, %c0_3] : memref<25x128xbf16, #tpu.memory_space<vmem>>, vector<25x128xbf16>
    %cst = arith.constant dense<0.000000e+00> : vector<1024x128xf32>
    %3 = tpu.matmul %1, %2, %cst {dimension_numbers = #tpu.dot_dimension_numbers<[1], [0], [0], [1], [0, 0, 1, 1], [], []>} : vector<1024x25xbf16>, vector<25x128xbf16>, vector<1024x128xf32> -> vector<1024x128xf32>
    %4 = vector.extract_strided_slice %3 {offsets = [0, 0], sizes = [256, 128], strides = [1, 1]} : vector<1024x128xf32> to vector<256x128xf32>
    %5 = vector.extract_strided_slice %3 {offsets = [256, 0], sizes = [256, 128], strides = [1, 1]} : vector<1024x128xf32> to vector<256x128xf32>
    %6 = arith.maximumf %4, %5 : vector<256x128xf32>
    %7 = vector.extract_strided_slice %3 {offsets = [512, 0], sizes = [256, 128], strides = [1, 1]} : vector<1024x128xf32> to vector<256x128xf32>
    %8 = vector.extract_strided_slice %3 {offsets = [768, 0], sizes = [256, 128], strides = [1, 1]} : vector<1024x128xf32> to vector<256x128xf32>
    %9 = arith.maximumf %7, %8 : vector<256x128xf32>
    %10 = arith.maximumf %6, %9 : vector<256x128xf32>
    %c0_4 = arith.constant 0 : index
    %c0_5 = arith.constant 0 : index
    %11 = vector.load %arg3[%c0_4, %c0_5] : memref<1x128xf32, #tpu.memory_space<vmem>>, vector<1x128xf32>
    %12 = vector.broadcast %11 : vector<1x128xf32> to vector<256x128xf32>
    %13 = arith.addf %10, %12 : vector<256x128xf32>
    %cst_6 = arith.constant 0.000000e+00 : f32
    %14 = vector.broadcast %cst_6 : f32 to vector<256x128xf32>
    %15 = arith.maximumf %13, %14 : vector<256x128xf32>
    %16 = arith.truncf %15 : vector<256x128xf32> to vector<256x128xbf16>
    %c0_7 = arith.constant 0 : index
    %c0_8 = arith.constant 0 : index
    %17 = vector.load %arg4[%c0_7, %c0_8] : memref<256x128xbf16, #tpu.memory_space<vmem>>, vector<256x128xbf16>
    tpu.vector_store %arg4[%c0_7, %c0_8], %16 {strides = array<i32>} : memref<256x128xbf16, #tpu.memory_space<vmem>>, vector<256x128xbf16>,
    return
  }
  func.func @transform_0(%arg0: i32) -> (i32, i32, i32) {
    %c0_i32 = arith.constant 0 : i32
    %c0_i32_0 = arith.constant 0 : i32
    %c0_i32_1 = arith.constant 0 : i32
    return %c0_i32, %arg0, %c0_i32_0 : i32, i32, i32
  }
  func.func @transform_1(%arg0: i32) -> (i32, i32) {
    %c0_i32 = arith.constant 0 : i32
    %c0_i32_0 = arith.constant 0 : i32
    %c0_i32_1 = arith.constant 0 : i32
    return %c0_i32, %c0_i32_0 : i32, i32
  }
  func.func @transform_2(%arg0: i32) -> (i32, i32) {
    %c0_i32 = arith.constant 0 : i32
    %c0_i32_0 = arith.constant 0 : i32
    %c0_i32_1 = arith.constant 0 : i32
    return %c0_i32, %c0_i32_0 : i32, i32
  }
  func.func @transform_3(%arg0: i32) -> (i32, i32) {
    %c0_i32 = arith.constant 0 : i32
    %c0_i32_0 = arith.constant 0 : i32
    return %arg0, %c0_i32 : i32, i32
  }
}

module attributes {stable_mosaic.version = 11 : i64} {
  func.func @_conv_pool_relu_kernel(%arg0: i32, %arg1: memref<4x32x250xbf16, #tpu.memory_space<vmem>>, %arg2: memref<250x128xbf16, #tpu.memory_space<vmem>>, %arg3: memref<1x128xf32, #tpu.memory_space<vmem>>, %arg4: memref<32x128xbf16, #tpu.memory_space<vmem>>) attributes {dimension_semantics = [#tpu.dimension_semantics<parallel>], iteration_bounds = array<i64: 1>, scalar_prefetch = 0 : i64, scratch_operands = 0 : i64, tpu.core_type = #tpu.core_type<tc>, window_params = [{transform_indices = @transform_0, window_bounds = array<i64: 4, 32, 250>}, {pipeline_mode = #tpu.pipeline_mode<synchronous>, transform_indices = @transform_1, window_bounds = array<i64: 250, 128>}, {pipeline_mode = #tpu.pipeline_mode<synchronous>, transform_indices = @transform_2, window_bounds = array<i64: 1, 128>}, {transform_indices = @transform_3, window_bounds = array<i64: 32, 128>}]} {
    %c0 = arith.constant 0 : index
    %c0_0 = arith.constant 0 : index
    %c0_1 = arith.constant 0 : index
    %0 = vector.load %arg1[%c0, %c0_0, %c0_1] : memref<4x32x250xbf16, #tpu.memory_space<vmem>>, vector<4x32x250xbf16>
    %1 = vector.shape_cast %0 : vector<4x32x250xbf16> to vector<128x250xbf16>
    %c0_2 = arith.constant 0 : index
    %c0_3 = arith.constant 0 : index
    %2 = vector.load %arg2[%c0_2, %c0_3] : memref<250x128xbf16, #tpu.memory_space<vmem>>, vector<250x128xbf16>
    %cst = arith.constant dense<0.000000e+00> : vector<128x128xf32>
    %3 = tpu.matmul %1, %2, %cst {dimension_numbers = #tpu.dot_dimension_numbers<[1], [0], [0], [1], [0, 0, 1, 1], [], []>} : vector<128x250xbf16>, vector<250x128xbf16>, vector<128x128xf32> -> vector<128x128xf32>
    %4 = vector.extract_strided_slice %3 {offsets = [0, 0], sizes = [32, 128], strides = [1, 1]} : vector<128x128xf32> to vector<32x128xf32>
    %5 = vector.extract_strided_slice %3 {offsets = [32, 0], sizes = [32, 128], strides = [1, 1]} : vector<128x128xf32> to vector<32x128xf32>
    %6 = arith.maximumf %4, %5 : vector<32x128xf32>
    %7 = vector.extract_strided_slice %3 {offsets = [64, 0], sizes = [32, 128], strides = [1, 1]} : vector<128x128xf32> to vector<32x128xf32>
    %8 = vector.extract_strided_slice %3 {offsets = [96, 0], sizes = [32, 128], strides = [1, 1]} : vector<128x128xf32> to vector<32x128xf32>
    %9 = arith.maximumf %7, %8 : vector<32x128xf32>
    %10 = arith.maximumf %6, %9 : vector<32x128xf32>
    %c0_4 = arith.constant 0 : index
    %c0_5 = arith.constant 0 : index
    %11 = vector.load %arg3[%c0_4, %c0_5] : memref<1x128xf32, #tpu.memory_space<vmem>>, vector<1x128xf32>
    %12 = vector.broadcast %11 : vector<1x128xf32> to vector<32x128xf32>
    %13 = arith.addf %10, %12 : vector<32x128xf32>
    %cst_6 = arith.constant 0.000000e+00 : f32
    %14 = vector.broadcast %cst_6 : f32 to vector<32x128xf32>
    %15 = arith.maximumf %13, %14 : vector<32x128xf32>
    %16 = arith.truncf %15 : vector<32x128xf32> to vector<32x128xbf16>
    %c0_7 = arith.constant 0 : index
    %c0_8 = arith.constant 0 : index
    %17 = vector.load %arg4[%c0_7, %c0_8] : memref<32x128xbf16, #tpu.memory_space<vmem>>, vector<32x128xbf16>
    tpu.vector_store %arg4[%c0_7, %c0_8], %16 {strides = array<i32>} : memref<32x128xbf16, #tpu.memory_space<vmem>>, vector<32x128xbf16>,
    return
  }
  func.func @transform_0(%arg0: i32) -> (i32, i32, i32) {
    %c0_i32 = arith.constant 0 : i32
    %c0_i32_0 = arith.constant 0 : i32
    %c0_i32_1 = arith.constant 0 : i32
    return %c0_i32, %arg0, %c0_i32_0 : i32, i32, i32
  }
  func.func @transform_1(%arg0: i32) -> (i32, i32) {
    %c0_i32 = arith.constant 0 : i32
    %c0_i32_0 = arith.constant 0 : i32
    %c0_i32_1 = arith.constant 0 : i32
    return %c0_i32, %c0_i32_0 : i32, i32
  }
  func.func @transform_2(%arg0: i32) -> (i32, i32) {
    %c0_i32 = arith.constant 0 : i32
    %c0_i32_0 = arith.constant 0 : i32
    %c0_i32_1 = arith.constant 0 : i32
    return %c0_i32, %c0_i32_0 : i32, i32
  }
  func.func @transform_3(%arg0: i32) -> (i32, i32) {
    %c0_i32 = arith.constant 0 : i32
    %c0_i32_0 = arith.constant 0 : i32
    return %arg0, %c0_i32 : i32, i32
  }
}

module attributes {stable_mosaic.version = 11 : i64} {
  func.func @_mlp_kernel(%arg0: i32, %arg1: memref<16x320xbf16, #tpu.memory_space<vmem>>, %arg2: memref<320x128xbf16, #tpu.memory_space<vmem>>, %arg3: memref<1x128xf32, #tpu.memory_space<vmem>>, %arg4: memref<128x128xbf16, #tpu.memory_space<vmem>>, %arg5: memref<1x128xf32, #tpu.memory_space<vmem>>, %arg6: memref<16x128xf32, #tpu.memory_space<vmem>>, %arg7: memref<16x128xf32, #tpu.memory_space<vmem>>) attributes {dimension_semantics = [#tpu.dimension_semantics<parallel>], iteration_bounds = array<i64: 1>, scalar_prefetch = 0 : i64, scratch_operands = 0 : i64, tpu.core_type = #tpu.core_type<tc>, window_params = [{transform_indices = @transform_0, window_bounds = array<i64: 16, 320>}, {pipeline_mode = #tpu.pipeline_mode<synchronous>, transform_indices = @transform_1, window_bounds = array<i64: 320, 128>}, {pipeline_mode = #tpu.pipeline_mode<synchronous>, transform_indices = @transform_2, window_bounds = array<i64: 1, 128>}, {pipeline_mode = #tpu.pipeline_mode<synchronous>, transform_indices = @transform_3, window_bounds = array<i64: 128, 128>}, {pipeline_mode = #tpu.pipeline_mode<synchronous>, transform_indices = @transform_4, window_bounds = array<i64: 1, 128>}, {transform_indices = @transform_5, window_bounds = array<i64: 16, 128>}, {transform_indices = @transform_6, window_bounds = array<i64: 16, 128>}]} {
    %c0 = arith.constant 0 : index
    %c0_0 = arith.constant 0 : index
    %0 = vector.load %arg1[%c0, %c0_0] : memref<16x320xbf16, #tpu.memory_space<vmem>>, vector<16x320xbf16>
    %c0_1 = arith.constant 0 : index
    %c0_2 = arith.constant 0 : index
    %1 = vector.load %arg2[%c0_1, %c0_2] : memref<320x128xbf16, #tpu.memory_space<vmem>>, vector<320x128xbf16>
    %cst = arith.constant dense<0.000000e+00> : vector<16x128xf32>
    %2 = tpu.matmul %0, %1, %cst {dimension_numbers = #tpu.dot_dimension_numbers<[1], [0], [0], [1], [0, 0, 1, 1], [], []>} : vector<16x320xbf16>, vector<320x128xbf16>, vector<16x128xf32> -> vector<16x128xf32>
    %c0_3 = arith.constant 0 : index
    %c0_4 = arith.constant 0 : index
    %3 = vector.load %arg3[%c0_3, %c0_4] : memref<1x128xf32, #tpu.memory_space<vmem>>, vector<1x128xf32>
    %4 = vector.broadcast %3 : vector<1x128xf32> to vector<16x128xf32>
    %5 = arith.addf %2, %4 : vector<16x128xf32>
    %cst_5 = arith.constant 0.000000e+00 : f32
    %6 = vector.broadcast %cst_5 : f32 to vector<16x128xf32>
    %7 = arith.maximumf %5, %6 : vector<16x128xf32>
    %c0_6 = arith.constant 0 : index
    %c0_7 = arith.constant 0 : index
    %8 = vector.load %arg7[%c0_6, %c0_7] : memref<16x128xf32, #tpu.memory_space<vmem>>, vector<16x128xf32>
    tpu.vector_store %arg7[%c0_6, %c0_7], %7 {strides = array<i32>} : memref<16x128xf32, #tpu.memory_space<vmem>>, vector<16x128xf32>,
    %9 = arith.truncf %7 : vector<16x128xf32> to vector<16x128xbf16>
    %c0_8 = arith.constant 0 : index
    %c0_9 = arith.constant 0 : index
    %10 = vector.load %arg4[%c0_8, %c0_9] : memref<128x128xbf16, #tpu.memory_space<vmem>>, vector<128x128xbf16>
    %cst_10 = arith.constant dense<0.000000e+00> : vector<16x128xf32>
    %11 = tpu.matmul %9, %10, %cst_10 {dimension_numbers = #tpu.dot_dimension_numbers<[1], [0], [0], [1], [0, 0, 1, 1], [], []>} : vector<16x128xbf16>, vector<128x128xbf16>, vector<16x128xf32> -> vector<16x128xf32>
    %c0_11 = arith.constant 0 : index
    %c0_12 = arith.constant 0 : index
    %12 = vector.load %arg5[%c0_11, %c0_12] : memref<1x128xf32, #tpu.memory_space<vmem>>, vector<1x128xf32>
    %13 = vector.broadcast %12 : vector<1x128xf32> to vector<16x128xf32>
    %14 = arith.addf %11, %13 : vector<16x128xf32>
    %c0_13 = arith.constant 0 : index
    %c0_14 = arith.constant 0 : index
    %15 = vector.load %arg6[%c0_13, %c0_14] : memref<16x128xf32, #tpu.memory_space<vmem>>, vector<16x128xf32>
    tpu.vector_store %arg6[%c0_13, %c0_14], %14 {strides = array<i32>} : memref<16x128xf32, #tpu.memory_space<vmem>>, vector<16x128xf32>,
    return
  }
  func.func @transform_0(%arg0: i32) -> (i32, i32) {
    %c0_i32 = arith.constant 0 : i32
    %c0_i32_0 = arith.constant 0 : i32
    return %arg0, %c0_i32 : i32, i32
  }
  func.func @transform_1(%arg0: i32) -> (i32, i32) {
    %c0_i32 = arith.constant 0 : i32
    %c0_i32_0 = arith.constant 0 : i32
    %c0_i32_1 = arith.constant 0 : i32
    return %c0_i32, %c0_i32_0 : i32, i32
  }
  func.func @transform_2(%arg0: i32) -> (i32, i32) {
    %c0_i32 = arith.constant 0 : i32
    %c0_i32_0 = arith.constant 0 : i32
    %c0_i32_1 = arith.constant 0 : i32
    return %c0_i32, %c0_i32_0 : i32, i32
  }
  func.func @transform_3(%arg0: i32) -> (i32, i32) {
    %c0_i32 = arith.constant 0 : i32
    %c0_i32_0 = arith.constant 0 : i32
    %c0_i32_1 = arith.constant 0 : i32
    return %c0_i32, %c0_i32_0 : i32, i32
  }
  func.func @transform_4(%arg0: i32) -> (i32, i32) {
    %c0_i32 = arith.constant 0 : i32
    %c0_i32_0 = arith.constant 0 : i32
    %c0_i32_1 = arith.constant 0 : i32
    return %c0_i32, %c0_i32_0 : i32, i32
  }
  func.func @transform_5(%arg0: i32) -> (i32, i32) {
    %c0_i32 = arith.constant 0 : i32
    %c0_i32_0 = arith.constant 0 : i32
    return %arg0, %c0_i32 : i32, i32
  }
  func.func @transform_6(%arg0: i32) -> (i32, i32) {
    %c0_i32 = arith.constant 0 : i32
    %c0_i32_0 = arith.constant 0 : i32
    return %arg0, %c0_i32 : i32, i32
  }
}

</mosaic_0001>

<llo_original>
// kernel: net1_forward.3
$region0: #{net1_forward.3}
  #allocation0 [shape = 'u32[]', space=smem, size = 0x4, offset = 0x4, fixed_abs, tag = 'smem constant byte address 0x4 - core index']
  #allocation1 [shape = 'u32[72,128]{1,0:T(1,128)}', space=vmem, size = 0x9000, scoped, tag = 'internal scratch']
  %s0 = inlined_call_operand.vmem [shape: bf16[4,512,25], index: 0, kind: input, shape index: {}]
  %s1 = inlined_call_operand.vmem [shape: bf16[25,128], index: 1, kind: input, shape index: {}]
  %s2 = inlined_call_operand.vmem [shape: f32[1,128], index: 2, kind: input, shape index: {}]
  %s3 = inlined_call_operand.vmem [shape: bf16[512,128], index: 3, kind: output, shape index: {}]
  %s4 = sld [smem:[#allocation0]]
  $region86: #{net1_forward.3} parent=0
    _
  %s6 = ssub.s32 1, %s4
  %s7 = scalar_select 0, %s6, %s4
  $region1: #{net1_forward.3} parent=0
    #allocation2 [shape = 'u8[524288]{0}', space=vmem, size = 0x80000, scoped, tag = 'input window, operand 0']
    loop: start=0, step=1, limit=4
    $region2: #{net1_forward.3} parent=1 // loop_pre_header
      _
    $region3: #{net1_forward.3} parent=1 // loop_header
      %s9 = sphi 0, %s13
      %p10 = scmp.ge.s32.totalorder %s9, 4
      %s19 = sphi 0, %s21
      %s22 = sphi 0, %s19
      %s23 = sphi 0, %s22
      %s39 = sphi 0, %s23
      %s43 = sphi 0, %s43
      %s45 = sphi 0, %s43
      %s46 = sphi 0, %s45
      %s60 = sphi 0, %s46
      %s64 = sphi 0, %s64
      %s66 = sphi 0, %s64
      %s67 = sphi 0, %s66
      %s81 = sphi 0, %s67
      %s87 = sphi 0, %s89
      %s90 = sphi 0, %s87
      %s91 = sphi 0, %s90
      %s107 = sphi 0, %s91
    $region4: #{net1_forward.3} parent=1 // loop_header_branch
      %12 = sbr.rel (%p10) target = $region8
    $region5: #{net1_forward.3} parent=1 // loop_body
      %s14 = ssub.s32 %s9, 1
      %s15 = ssub.s32 %s9, 2
      %s16 = sadd.s32 %s9, 1
      %s17 = ssub.s32 %s9, %s16
      %p18 = scmp.eq.s32.totalorder %s17, 0
      %s20 = sadd.s32 %s19, 1
      %s21 = scalar_select %p18, %s19, %s20
      %p24 = pneg %p18
      %p25 = scmp.eq.s32.totalorder %s9, 1
      %p26 = por %p24, %p25
      %p27 = scmp.ne.s32.totalorder %s19, %s22
      %p28 = scmp.eq.s32.totalorder %s9, 0
      %p29 = por %p27, %p28
      %p30 = scmp.ne.s32.totalorder %s19, %s22
      %p31 = scmp.eq.s32.totalorder %s14, 1
      %p32 = por %p30, %p31
      %p33 = scmp.ne.s32.totalorder %s22, %s23
      %p34 = scmp.eq.s32.totalorder %s14, 0
      %p35 = por %p33, %p34
      %p36 = scmp.ne.s32.totalorder %s22, %s23
      %p37 = scmp.eq.s32.totalorder %s15, 1
      %p38 = por %p36, %p37
      %p40 = scmp.ne.s32.totalorder %s23, %s39
      %p41 = scmp.eq.s32.totalorder %s15, 0
      %p42 = por %p40, %p41
      %s44 = sadd.s32 %s43, 1
      %p47 = scmp.eq.s32.totalorder %s9, 1
      %p48 = scmp.ne.s32.totalorder %s43, %s45
      %p49 = scmp.eq.s32.totalorder %s9, 0
      %p50 = por %p48, %p49
      %p51 = scmp.ne.s32.totalorder %s43, %s45
      %p52 = scmp.eq.s32.totalorder %s14, 1
      %p53 = por %p51, %p52
      %p54 = scmp.ne.s32.totalorder %s45, %s46
      %p55 = scmp.eq.s32.totalorder %s14, 0
      %p56 = por %p54, %p55
      %p57 = scmp.ne.s32.totalorder %s45, %s46
      %p58 = scmp.eq.s32.totalorder %s15, 1
      %p59 = por %p57, %p58
      %p61 = scmp.ne.s32.totalorder %s46, %s60
      %p62 = scmp.eq.s32.totalorder %s15, 0
      %p63 = por %p61, %p62
      %s65 = sadd.s32 %s64, 1
      %p68 = scmp.eq.s32.totalorder %s9, 1
      %p69 = scmp.ne.s32.totalorder %s64, %s66
      %p70 = scmp.eq.s32.totalorder %s9, 0
      %p71 = por %p69, %p70
      %p72 = scmp.ne.s32.totalorder %s64, %s66
      %p73 = scmp.eq.s32.totalorder %s14, 1
      %p74 = por %p72, %p73
      %p75 = scmp.ne.s32.totalorder %s66, %s67
      %p76 = scmp.eq.s32.totalorder %s14, 0
      %p77 = por %p75, %p76
      %p78 = scmp.ne.s32.totalorder %s66, %s67
      %p79 = scmp.eq.s32.totalorder %s15, 1
      %p80 = por %p78, %p79
      %p82 = scmp.ne.s32.totalorder %s67, %s81
      %p83 = scmp.eq.s32.totalorder %s15, 0
      %p84 = por %p82, %p83
      %s85 = ssub.s32 %s9, %s16
      %p86 = scmp.eq.s32.totalorder %s85, 0
      %s88 = sadd.s32 %s87, 1
      %s89 = scalar_select %p86, %s87, %s88
      %p92 = pneg %p86
      %p93 = scmp.eq.s32.totalorder %s9, 1
      %p94 = por %p92, %p93
      %p95 = scmp.ne.s32.totalorder %s87, %s90
      %p96 = scmp.eq.s32.totalorder %s9, 0
      %p97 = por %p95, %p96
      %p98 = scmp.ne.s32.totalorder %s87, %s90
      %p99 = scmp.eq.s32.totalorder %s14, 1
      %p100 = por %p98, %p99
      %p101 = scmp.ne.s32.totalorder %s90, %s91
      %p102 = scmp.eq.s32.totalorder %s14, 0
      %p103 = por %p101, %p102
      %p104 = scmp.ne.s32.totalorder %s90, %s91
      %p105 = scmp.eq.s32.totalorder %s15, 1
      %p106 = por %p104, %p105
      %p108 = scmp.ne.s32.totalorder %s91, %s107
      %p109 = scmp.eq.s32.totalorder %s15, 0
      %p110 = por %p108, %p109
      %p111 = scmp.le.s32.totalorder 1, %s9
      %p112 = scmp.lt.s32.totalorder %s9, 3
      %p113 = pnand %p111, %p112
      %p114 = pneg %p113
      // Predicated region
      $region9: #{net1_forward.3} parent=5 // pred_check
        _
      $region10: #{net1_forward.3} parent=5 // pred_check_branch
        %116 = sbr.rel (%p113) target = $region12
      $region11: #{net1_forward.3} parent=5 // pred_region
        %s117 = ssub.s32 %s9, 1
        // Predicated region
        $region13: #{net1_forward.3} parent=11 // pred_check
          %p118 = pneg %p56
        $region14: #{net1_forward.3} parent=11 // pred_check_branch
          %120 = sbr.rel (%p118) target = $region16
        $region15: #{net1_forward.3} parent=11 // pred_region
          _
        $region16: #{net1_forward.3} parent=11 // pred_fallthru
          _
        // Predicated region
        $region17: #{net1_forward.3} parent=11 // pred_check
          %p121 = pneg %p77
        $region18: #{net1_forward.3} parent=11 // pred_check_branch
          %123 = sbr.rel (%p121) target = $region20
        $region19: #{net1_forward.3} parent=11 // pred_region
          _
        $region20: #{net1_forward.3} parent=11 // pred_fallthru
          _
      $region12: #{net1_forward.3} parent=5 // pred_fallthru
        _
      %p124 = scmp.lt.s32.totalorder %s9, 2
      // Predicated region
      $region21: #{net1_forward.3} parent=5 // pred_check
        %p125 = pneg %p124
      $region22: #{net1_forward.3} parent=5 // pred_check_branch
        %127 = sbr.rel (%p125) target = $region24
      $region23: #{net1_forward.3} parent=5 // pred_region
        // Predicated region
        $region25: #{net1_forward.3} parent=23 // pred_check
          %p128 = pneg %p29
        $region26: #{net1_forward.3} parent=23 // pred_check_branch
          %130 = sbr.rel (%p128) target = $region28
        $region27: #{net1_forward.3} parent=23 // pred_region
          %s131 = sand.u32 %s19, 1
          %s132 = sand.u32 %s19, 1
          %s133 = smul.addr %s132, 512
          %s134 = scalar_lea.vmem [#allocation2], %s133
          %s135 = smul.u32 32, %s9
          %s136 = smul.addr %s135, 4
          %s137 = scalar_lea.vmem %s0, %s136
          // Predicated region
          $region29: #{net1_forward.3} parent=27 // pred_check
            _
          $region30: #{net1_forward.3} parent=27 // pred_check_branch
            %139 = sbr.rel (0) target = $region32
          $region31: #{net1_forward.3} parent=27 // pred_region
            // Predicated region
            $region33: #{net1_forward.3} parent=31 // pred_check
              _
            $region34: #{net1_forward.3} parent=31 // pred_check_branch
              %141 = sbr.rel target = $region36
            $region35: #{net1_forward.3} parent=31 // pred_region
              // Predicated region
              $region48: #{net1_forward.3} parent=35 // pred_check
                _
              $region49: #{net1_forward.3} parent=35 // pred_check_branch
                %411 = sbr.rel (0) target = $region51
              $region50: #{net1_forward.3} parent=35 // pred_region
                loop: start=0, step=1, limit=1
                $region52: #{net1_forward.3} parent=50 // loop_pre_header
                  _
                $region53: #{net1_forward.3} parent=50 // loop_header
                  %s413 = sphi 0, %s417
                  %p414 = scmp.ge.s32.totalorder %s413, 1
                  %s418 = sphi %s137, %s137
                  %s419 = sphi %s134, %s134
                $region54: #{net1_forward.3} parent=50 // loop_header_branch
                  %416 = sbr.rel (%p414) target = $region58
                $region55: #{net1_forward.3} parent=50 // loop_body
                  _
                $region56: #{net1_forward.3} parent=50 // loop_footer
                  %s417 = sadd.s32 1, %s413
                $region57: #{net1_forward.3} parent=50 // loop_footer_branch
                  %412 = sbr.rel target = $region53
                $region58: #{net1_forward.3} parent=50 // loop_exit
                  _
                %s421 = ssub.s32 16, 1
                loop: start=0, step=1, limit=1
                $region59: #{net1_forward.3} parent=50 // loop_pre_header
                  _
                $region60: #{net1_forward.3} parent=50 // loop_header
                  %s423 = sphi 0, %s427
                  %p424 = scmp.ge.s32.totalorder %s423, 1
                  %s428 = sphi %s137, %s137
                  %s429 = sphi %s134, %s134
                $region61: #{net1_forward.3} parent=50 // loop_header_branch
                  %426 = sbr.rel (%p424) target = $region65
                $region62: #{net1_forward.3} parent=50 // loop_body
                  %v430 = vld [vmem:[%s428] sm:%s421]
                  %431 = vst [vmem:[%s429] sm:%s421] %v430
                  %v432 = vld [vmem:[%s428 + $0x4] sm:%s421]
                  %433 = vst [vmem:[%s429 + $0x4] sm:%s421] %v432
                  %v434 = vld [vmem:[%s428 + $0x8] sm:%s421]
                  %435 = vst [vmem:[%s429 + $0x8] sm:%s421] %v434
                  %v436 = vld [vmem:[%s428 + $0xc] sm:%s421]
                  %437 = vst [vmem:[%s429 + $0xc] sm:%s421] %v436
                  %v438 = vld [vmem:[%s428 + $0x10] sm:%s421]
                  %439 = vst [vmem:[%s429 + $0x10] sm:%s421] %v438
                  %v440 = vld [vmem:[%s428 + $0x14] sm:%s421]
                  %441 = vst [vmem:[%s429 + $0x14] sm:%s421] %v440
                  %v442 = vld [vmem:[%s428 + $0x18] sm:%s421]
                  %443 = vst [vmem:[%s429 + $0x18] sm:%s421] %v442
                  %v444 = vld [vmem:[%s428 + $0x1c] sm:%s421]
                  %445 = vst [vmem:[%s429 + $0x1c] sm:%s421] %v444
                  %v446 = vld [vmem:[%s428 + $0x20] sm:%s421]
                  %447 = vst [vmem:[%s429 + $0x20] sm:%s421] %v446
                  %v448 = vld [vmem:[%s428 + $0x24] sm:%s421]
                  %449 = vst [vmem:[%s429 + $0x24] sm:%s421] %v448
                  %v450 = vld [vmem:[%s428 + $0x28] sm:%s421]
                  %451 = vst [vmem:[%s429 + $0x28] sm:%s421] %v450
                  %v452 = vld [vmem:[%s428 + $0x2c] sm:%s421]
                  %453 = vst [vmem:[%s429 + $0x2c] sm:%s421] %v452
                  %v454 = vld [vmem:[%s428 + $0x30] sm:%s421]
                  %455 = vst [vmem:[%s429 + $0x30] sm:%s421] %v454
                  %v456 = vld [vmem:[%s428 + $0x34] sm:%s421]
                  %457 = vst [vmem:[%s429 + $0x34] sm:%s421] %v456
                  %v458 = vld [vmem:[%s428 + $0x38] sm:%s421]
                  %459 = vst [vmem:[%s429 + $0x38] sm:%s421] %v458
                  %v460 = vld [vmem:[%s428 + $0x3c] sm:%s421]
                  %461 = vst [vmem:[%s429 + $0x3c] sm:%s421] %v460
                  %v462 = vld [vmem:[%s428 + $0x40] sm:%s421]
                  %463 = vst [vmem:[%s429 + $0x40] sm:%s421] %v462
                  %v464 = vld [vmem:[%s428 + $0x44] sm:%s421]
                  %465 = vst [vmem:[%s429 + $0x44] sm:%s421] %v464
                  %v466 = vld [vmem:[%s428 + $0x48] sm:%s421]
                  %467 = vst [vmem:[%s429 + $0x48] sm:%s421] %v466
                  %v468 = vld [vmem:[%s428 + $0x4c] sm:%s421]
                  %469 = vst [vmem:[%s429 + $0x4c] sm:%s421] %v468
                  %v470 = vld [vmem:[%s428 + $0x50] sm:%s421]
                  %471 = vst [vmem:[%s429 + $0x50] sm:%s421] %v470
                  %v472 = vld [vmem:[%s428 + $0x54] sm:%s421]
                  %473 = vst [vmem:[%s429 + $0x54] sm:%s421] %v472
                  %v474 = vld [vmem:[%s428 + $0x58] sm:%s421]
                  %475 = vst [vmem:[%s429 + $0x58] sm:%s421] %v474
                  %v476 = vld [vmem:[%s428 + $0x5c] sm:%s421]
                  %477 = vst [vmem:[%s429 + $0x5c] sm:%s421] %v476
                  %v478 = vld [vmem:[%s428 + $0x60] sm:%s421]
                  %479 = vst [vmem:[%s429 + $0x60] sm:%s421] %v478
                  %v480 = vld [vmem:[%s428 + $0x64] sm:%s421]
                  %481 = vst [vmem:[%s429 + $0x64] sm:%s421] %v480
                  %v482 = vld [vmem:[%s428 + $0x68] sm:%s421]
                  %483 = vst [vmem:[%s429 + $0x68] sm:%s421] %v482
                  %v484 = vld [vmem:[%s428 + $0x6c] sm:%s421]
                  %485 = vst [vmem:[%s429 + $0x6c] sm:%s421] %v484
                  %v486 = vld [vmem:[%s428 + $0x70] sm:%s421]
                  %487 = vst [vmem:[%s429 + $0x70] sm:%s421] %v486
                  %v488 = vld [vmem:[%s428 + $0x74] sm:%s421]
                  %489 = vst [vmem:[%s429 + $0x74] sm:%s421] %v488
                  %v490 = vld [vmem:[%s428 + $0x78] sm:%s421]
                  %491 = vst [vmem:[%s429 + $0x78] sm:%s421] %v490
                  %v492 = vld [vmem:[%s428 + $0x7c] sm:%s421]
                  %493 = vst [vmem:[%s429 + $0x7c] sm:%s421] %v492
                  %v494 = vld [vmem:[%s428 + $0x100] sm:%s421]
                  %495 = vst [vmem:[%s429 + $0x80] sm:%s421] %v494
                  %v496 = vld [vmem:[%s428 + $0x104] sm:%s421]
                  %497 = vst [vmem:[%s429 + $0x84] sm:%s421] %v496
                  %v498 = vld [vmem:[%s428 + $0x108] sm:%s421]
                  %499 = vst [vmem:[%s429 + $0x88] sm:%s421] %v498
                  %v500 = vld [vmem:[%s428 + $0x10c] sm:%s421]
                  %501 = vst [vmem:[%s429 + $0x8c] sm:%s421] %v500
                  %v502 = vld [vmem:[%s428 + $0x110] sm:%s421]
                  %503 = vst [vmem:[%s429 + $0x90] sm:%s421] %v502
                  %v504 = vld [vmem:[%s428 + $0x114] sm:%s421]
                  %505 = vst [vmem:[%s429 + $0x94] sm:%s421] %v504
                  %v506 = vld [vmem:[%s428 + $0x118] sm:%s421]
                  %507 = vst [vmem:[%s429 + $0x98] sm:%s421] %v506
                  %v508 = vld [vmem:[%s428 + $0x11c] sm:%s421]
                  %509 = vst [vmem:[%s429 + $0x9c] sm:%s421] %v508
                  %v510 = vld [vmem:[%s428 + $0x120] sm:%s421]
                  %511 = vst [vmem:[%s429 + $0xa0] sm:%s421] %v510
                  %v512 = vld [vmem:[%s428 + $0x124] sm:%s421]
                  %513 = vst [vmem:[%s429 + $0xa4] sm:%s421] %v512
                  %v514 = vld [vmem:[%s428 + $0x128] sm:%s421]
                  %515 = vst [vmem:[%s429 + $0xa8] sm:%s421] %v514
                  %v516 = vld [vmem:[%s428 + $0x12c] sm:%s421]
                  %517 = vst [vmem:[%s429 + $0xac] sm:%s421] %v516
                  %v518 = vld [vmem:[%s428 + $0x130] sm:%s421]
                  %519 = vst [vmem:[%s429 + $0xb0] sm:%s421] %v518
                  %v520 = vld [vmem:[%s428 + $0x134] sm:%s421]
                  %521 = vst [vmem:[%s429 + $0xb4] sm:%s421] %v520
                  %v522 = vld [vmem:[%s428 + $0x138] sm:%s421]
                  %523 = vst [vmem:[%s429 + $0xb8] sm:%s421] %v522
                  %v524 = vld [vmem:[%s428 + $0x13c] sm:%s421]
                  %525 = vst [vmem:[%s429 + $0xbc] sm:%s421] %v524
                  %v526 = vld [vmem:[%s428 + $0x140] sm:%s421]
                  %527 = vst [vmem:[%s429 + $0xc0] sm:%s421] %v526
                  %v528 = vld [vmem:[%s428 + $0x144] sm:%s421]
                  %529 = vst [vmem:[%s429 + $0xc4] sm:%s421] %v528
                  %v530 = vld [vmem:[%s428 + $0x148] sm:%s421]
                  %531 = vst [vmem:[%s429 + $0xc8] sm:%s421] %v530
                  %v532 = vld [vmem:[%s428 + $0x14c] sm:%s421]
                  %533 = vst [vmem:[%s429 + $0xcc] sm:%s421] %v532
                  %v534 = vld [vmem:[%s428 + $0x150] sm:%s421]
                  %535 = vst [vmem:[%s429 + $0xd0] sm:%s421] %v534
                  %v536 = vld [vmem:[%s428 + $0x154] sm:%s421]
                  %537 = vst [vmem:[%s429 + $0xd4] sm:%s421] %v536
                  %v538 = vld [vmem:[%s428 + $0x158] sm:%s421]
                  %539 = vst [vmem:[%s429 + $0xd8] sm:%s421] %v538
                  %v540 = vld [vmem:[%s428 + $0x15c] sm:%s421]
                  %541 = vst [vmem:[%s429 + $0xdc] sm:%s421] %v540
                  %v542 = vld [vmem:[%s428 + $0x160] sm:%s421]
                  %543 = vst [vmem:[%s429 + $0xe0] sm:%s421] %v542
                  %v544 = vld [vmem:[%s428 + $0x164] sm:%s421]
                  %545 = vst [vmem:[%s429 + $0xe4] sm:%s421] %v544
                  %v546 = vld [vmem:[%s428 + $0x168] sm:%s421]
                  %547 = vst [vmem:[%s429 + $0xe8] sm:%s421] %v546
                  %v548 = vld [vmem:[%s428 + $0x16c] sm:%s421]
                  %549 = vst [vmem:[%s429 + $0xec] sm:%s421] %v548
                  %v550 = vld [vmem:[%s428 + $0x170] sm:%s421]
                  %551 = vst [vmem:[%s429 + $0xf0] sm:%s421] %v550
                  %v552 = vld [vmem:[%s428 + $0x174] sm:%s421]
                  %553 = vst [vmem:[%s429 + $0xf4] sm:%s421] %v552
                  %v554 = vld [vmem:[%s428 + $0x178] sm:%s421]
                  %555 = vst [vmem:[%s429 + $0xf8] sm:%s421] %v554
                  %v556 = vld [vmem:[%s428 + $0x17c] sm:%s421]
                  %557 = vst [vmem:[%s429 + $0xfc] sm:%s421] %v556
                  %v558 = vld [vmem:[%s428 + $0x200] sm:%s421]
                  %559 = vst [vmem:[%s429 + $0x100] sm:%s421] %v558
                  %v560 = vld [vmem:[%s428 + $0x204] sm:%s421]
                  %561 = vst [vmem:[%s429 + $0x104] sm:%s421] %v560
                  %v562 = vld [vmem:[%s428 + $0x208] sm:%s421]
                  %563 = vst [vmem:[%s429 + $0x108] sm:%s421] %v562
                  %v564 = vld [vmem:[%s428 + $0x20c] sm:%s421]
                  %565 = vst [vmem:[%s429 + $0x10c] sm:%s421] %v564
                  %v566 = vld [vmem:[%s428 + $0x210] sm:%s421]
                  %567 = vst [vmem:[%s429 + $0x110] sm:%s421] %v566
                  %v568 = vld [vmem:[%s428 + $0x214] sm:%s421]
                  %569 = vst [vmem:[%s429 + $0x114] sm:%s421] %v568
                  %v570 = vld [vmem:[%s428 + $0x218] sm:%s421]
                  %571 = vst [vmem:[%s429 + $0x118] sm:%s421] %v570
                  %v572 = vld [vmem:[%s428 + $0x21c] sm:%s421]
                  %573 = vst [vmem:[%s429 + $0x11c] sm:%s421] %v572
                  %v574 = vld [vmem:[%s428 + $0x220] sm:%s421]
                  %575 = vst [vmem:[%s429 + $0x120] sm:%s421] %v574
                  %v576 = vld [vmem:[%s428 + $0x224] sm:%s421]
                  %577 = vst [vmem:[%s429 + $0x124] sm:%s421] %v576
                  %v578 = vld [vmem:[%s428 + $0x228] sm:%s421]
                  %579 = vst [vmem:[%s429 + $0x128] sm:%s421] %v578
                  %v580 = vld [vmem:[%s428 + $0x22c] sm:%s421]
                  %581 = vst [vmem:[%s429 + $0x12c] sm:%s421] %v580
                  %v582 = vld [vmem:[%s428 + $0x230] sm:%s421]
                  %583 = vst [vmem:[%s429 + $0x130] sm:%s421] %v582
                  %v584 = vld [vmem:[%s428 + $0x234] sm:%s421]
                  %585 = vst [vmem:[%s429 + $0x134] sm:%s421] %v584
                  %v586 = vld [vmem:[%s428 + $0x238] sm:%s421]
                  %587 = vst [vmem:[%s429 + $0x138] sm:%s421] %v586
                  %v588 = vld [vmem:[%s428 + $0x23c] sm:%s421]
                  %589 = vst [vmem:[%s429 + $0x13c] sm:%s421] %v588
                  %v590 = vld [vmem:[%s428 + $0x240] sm:%s421]
                  %591 = vst [vmem:[%s429 + $0x140] sm:%s421] %v590
                  %v592 = vld [vmem:[%s428 + $0x244] sm:%s421]
                  %593 = vst [vmem:[%s429 + $0x144] sm:%s421] %v592
                  %v594 = vld [vmem:[%s428 + $0x248] sm:%s421]
                  %595 = vst [vmem:[%s429 + $0x148] sm:%s421] %v594
                  %v596 = vld [vmem:[%s428 + $0x24c] sm:%s421]
                  %597 = vst [vmem:[%s429 + $0x14c] sm:%s421] %v596
                  %v598 = vld [vmem:[%s428 + $0x250] sm:%s421]
                  %599 = vst [vmem:[%s429 + $0x150] sm:%s421] %v598
                  %v600 = vld [vmem:[%s428 + $0x254] sm:%s421]
                  %601 = vst [vmem:[%s429 + $0x154] sm:%s421] %v600
                  %v602 = vld [vmem:[%s428 + $0x258] sm:%s421]
                  %603 = vst [vmem:[%s429 + $0x158] sm:%s421] %v602
                  %v604 = vld [vmem:[%s428 + $0x25c] sm:%s421]
                  %605 = vst [vmem:[%s429 + $0x15c] sm:%s421] %v604
                  %v606 = vld [vmem:[%s428 + $0x260] sm:%s421]
                  %607 = vst [vmem:[%s429 + $0x160] sm:%s421] %v606
                  %v608 = vld [vmem:[%s428 + $0x264] sm:%s421]
                  %609 = vst [vmem:[%s429 + $0x164] sm:%s421] %v608
                  %v610 = vld [vmem:[%s428 + $0x268] sm:%s421]
                  %611 = vst [vmem:[%s429 + $0x168] sm:%s421] %v610
                  %v612 = vld [vmem:[%s428 + $0x26c] sm:%s421]
                  %613 = vst [vmem:[%s429 + $0x16c] sm:%s421] %v612
                  %v614 = vld [vmem:[%s428 + $0x270] sm:%s421]
                  %615 = vst [vmem:[%s429 + $0x170] sm:%s421] %v614
                  %v616 = vld [vmem:[%s428 + $0x274] sm:%s421]
                  %617 = vst [vmem:[%s429 + $0x174] sm:%s421] %v616
                  %v618 = vld [vmem:[%s428 + $0x278] sm:%s421]
                  %619 = vst [vmem:[%s429 + $0x178] sm:%s421] %v618
                  %v620 = vld [vmem:[%s428 + $0x27c] sm:%s421]
                  %621 = vst [vmem:[%s429 + $0x17c] sm:%s421] %v620
                  %v622 = vld [vmem:[%s428 + $0x300] sm:%s421]
                  %623 = vst [vmem:[%s429 + $0x180] sm:%s421] %v622
                  %v624 = vld [vmem:[%s428 + $0x304] sm:%s421]
                  %625 = vst [vmem:[%s429 + $0x184] sm:%s421] %v624
                  %v626 = vld [vmem:[%s428 + $0x308] sm:%s421]
                  %627 = vst [vmem:[%s429 + $0x188] sm:%s421] %v626
                  %v628 = vld [vmem:[%s428 + $0x30c] sm:%s421]
                  %629 = vst [vmem:[%s429 + $0x18c] sm:%s421] %v628
                  %v630 = vld [vmem:[%s428 + $0x310] sm:%s421]
                  %631 = vst [vmem:[%s429 + $0x190] sm:%s421] %v630
                  %v632 = vld [vmem:[%s428 + $0x314] sm:%s421]
                  %633 = vst [vmem:[%s429 + $0x194] sm:%s421] %v632
                  %v634 = vld [vmem:[%s428 + $0x318] sm:%s421]
                  %635 = vst [vmem:[%s429 + $0x198] sm:%s421] %v634
                  %v636 = vld [vmem:[%s428 + $0x31c] sm:%s421]
                  %637 = vst [vmem:[%s429 + $0x19c] sm:%s421] %v636
                  %v638 = vld [vmem:[%s428 + $0x320] sm:%s421]
                  %639 = vst [vmem:[%s429 + $0x1a0] sm:%s421] %v638
                  %v640 = vld [vmem:[%s428 + $0x324] sm:%s421]
                  %641 = vst [vmem:[%s429 + $0x1a4] sm:%s421] %v640
                  %v642 = vld [vmem:[%s428 + $0x328] sm:%s421]
                  %643 = vst [vmem:[%s429 + $0x1a8] sm:%s421] %v642
                  %v644 = vld [vmem:[%s428 + $0x32c] sm:%s421]
                  %645 = vst [vmem:[%s429 + $0x1ac] sm:%s421] %v644
                  %v646 = vld [vmem:[%s428 + $0x330] sm:%s421]
                  %647 = vst [vmem:[%s429 + $0x1b0] sm:%s421] %v646
                  %v648 = vld [vmem:[%s428 + $0x334] sm:%s421]
                  %649 = vst [vmem:[%s429 + $0x1b4] sm:%s421] %v648
                  %v650 = vld [vmem:[%s428 + $0x338] sm:%s421]
                  %651 = vst [vmem:[%s429 + $0x1b8] sm:%s421] %v650
                  %v652 = vld [vmem:[%s428 + $0x33c] sm:%s421]
                  %653 = vst [vmem:[%s429 + $0x1bc] sm:%s421] %v652
                  %v654 = vld [vmem:[%s428 + $0x340] sm:%s421]
                  %655 = vst [vmem:[%s429 + $0x1c0] sm:%s421] %v654
                  %v656 = vld [vmem:[%s428 + $0x344] sm:%s421]
                  %657 = vst [vmem:[%s429 + $0x1c4] sm:%s421] %v656
                  %v658 = vld [vmem:[%s428 + $0x348] sm:%s421]
                  %659 = vst [vmem:[%s429 + $0x1c8] sm:%s421] %v658
                  %v660 = vld [vmem:[%s428 + $0x34c] sm:%s421]
                  %661 = vst [vmem:[%s429 + $0x1cc] sm:%s421] %v660
                  %v662 = vld [vmem:[%s428 + $0x350] sm:%s421]
                  %663 = vst [vmem:[%s429 + $0x1d0] sm:%s421] %v662
                  %v664 = vld [vmem:[%s428 + $0x354] sm:%s421]
                  %665 = vst [vmem:[%s429 + $0x1d4] sm:%s421] %v664
                  %v666 = vld [vmem:[%s428 + $0x358] sm:%s421]
                  %667 = vst [vmem:[%s429 + $0x1d8] sm:%s421] %v666
                  %v668 = vld [vmem:[%s428 + $0x35c] sm:%s421]
                  %669 = vst [vmem:[%s429 + $0x1dc] sm:%s421] %v668
                  %v670 = vld [vmem:[%s428 + $0x360] sm:%s421]
                  %671 = vst [vmem:[%s429 + $0x1e0] sm:%s421] %v670
                  %v672 = vld [vmem:[%s428 + $0x364] sm:%s421]
                  %673 = vst [vmem:[%s429 + $0x1e4] sm:%s421] %v672
                  %v674 = vld [vmem:[%s428 + $0x368] sm:%s421]
                  %675 = vst [vmem:[%s429 + $0x1e8] sm:%s421] %v674
                  %v676 = vld [vmem:[%s428 + $0x36c] sm:%s421]
                  %677 = vst [vmem:[%s429 + $0x1ec] sm:%s421] %v676
                  %v678 = vld [vmem:[%s428 + $0x370] sm:%s421]
                  %679 = vst [vmem:[%s429 + $0x1f0] sm:%s421] %v678
                  %v680 = vld [vmem:[%s428 + $0x374] sm:%s421]
                  %681 = vst [vmem:[%s429 + $0x1f4] sm:%s421] %v680
                  %v682 = vld [vmem:[%s428 + $0x378] sm:%s421]
                  %683 = vst [vmem:[%s429 + $0x1f8] sm:%s421] %v682
                  %v684 = vld [vmem:[%s428 + $0x37c] sm:%s421]
                  %685 = vst [vmem:[%s429 + $0x1fc] sm:%s421] %v684
                $region63: #{net1_forward.3} parent=50 // loop_footer
                  %s427 = sadd.s32 1, %s423
                $region64: #{net1_forward.3} parent=50 // loop_footer_branch
                  %422 = sbr.rel target = $region60
                $region65: #{net1_forward.3} parent=50 // loop_exit
                  _
              $region51: #{net1_forward.3} parent=35 // pred_fallthru
                _
            $region36: #{net1_forward.3} parent=31 // pred_fallthru
              _
            // Predicated region
            $region37: #{net1_forward.3} parent=31 // pred_check
              _
            $region38: #{net1_forward.3} parent=31 // pred_check_branch
              %143 = sbr.rel (0) target = $region40
            $region39: #{net1_forward.3} parent=31 // pred_region
              %s145 = ssub.s32 16, 1
              loop: start=0, step=1, limit=1
              $region41: #{net1_forward.3} parent=39 // loop_pre_header
                _
              $region42: #{net1_forward.3} parent=39 // loop_header
                %s147 = sphi 0, %s151
                %p148 = scmp.ge.s32.totalorder %s147, 1
                %s152 = sphi %s137, %s137
                %s153 = sphi %s134, %s134
              $region43: #{net1_forward.3} parent=39 // loop_header_branch
                %150 = sbr.rel (%p148) target = $region47
              $region44: #{net1_forward.3} parent=39 // loop_body
                %v154 = vld [vmem:[%s152] sm:%s145]
                %155 = vst [vmem:[%s153] sm:%s145] %v154
                %v156 = vld [vmem:[%s152 + $0x4] sm:%s145]
                %157 = vst [vmem:[%s153 + $0x4] sm:%s145] %v156
                %v158 = vld [vmem:[%s152 + $0x8] sm:%s145]
                %159 = vst [vmem:[%s153 + $0x8] sm:%s145] %v158
                %v160 = vld [vmem:[%s152 + $0xc] sm:%s145]
                %161 = vst [vmem:[%s153 + $0xc] sm:%s145] %v160
                %v162 = vld [vmem:[%s152 + $0x10] sm:%s145]
                %163 = vst [vmem:[%s153 + $0x10] sm:%s145] %v162
                %v164 = vld [vmem:[%s152 + $0x14] sm:%s145]
                %165 = vst [vmem:[%s153 + $0x14] sm:%s145] %v164
                %v166 = vld [vmem:[%s152 + $0x18] sm:%s145]
                %167 = vst [vmem:[%s153 + $0x18] sm:%s145] %v166
                %v168 = vld [vmem:[%s152 + $0x1c] sm:%s145]
                %169 = vst [vmem:[%s153 + $0x1c] sm:%s145] %v168
                %v170 = vld [vmem:[%s152 + $0x20] sm:%s145]
                %171 = vst [vmem:[%s153 + $0x20] sm:%s145] %v170
                %v172 = vld [vmem:[%s152 + $0x24] sm:%s145]
                %173 = vst [vmem:[%s153 + $0x24] sm:%s145] %v172
                %v174 = vld [vmem:[%s152 + $0x28] sm:%s145]
                %175 = vst [vmem:[%s153 + $0x28] sm:%s145] %v174
                %v176 = vld [vmem:[%s152 + $0x2c] sm:%s145]
                %177 = vst [vmem:[%s153 + $0x2c] sm:%s145] %v176
                %v178 = vld [vmem:[%s152 + $0x30] sm:%s145]
                %179 = vst [vmem:[%s153 + $0x30] sm:%s145] %v178
                %v180 = vld [vmem:[%s152 + $0x34] sm:%s145]
                %181 = vst [vmem:[%s153 + $0x34] sm:%s145] %v180
                %v182 = vld [vmem:[%s152 + $0x38] sm:%s145]
                %183 = vst [vmem:[%s153 + $0x38] sm:%s145] %v182
                %v184 = vld [vmem:[%s152 + $0x3c] sm:%s145]
                %185 = vst [vmem:[%s153 + $0x3c] sm:%s145] %v184
                %v186 = vld [vmem:[%s152 + $0x40] sm:%s145]
                %187 = vst [vmem:[%s153 + $0x40] sm:%s145] %v186
                %v188 = vld [vmem:[%s152 + $0x44] sm:%s145]
                %189 = vst [vmem:[%s153 + $0x44] sm:%s145] %v188
                %v190 = vld [vmem:[%s152 + $0x48] sm:%s145]
                %191 = vst [vmem:[%s153 + $0x48] sm:%s145] %v190
                %v192 = vld [vmem:[%s152 + $0x4c] sm:%s145]
                %193 = vst [vmem:[%s153 + $0x4c] sm:%s145] %v192
                %v194 = vld [vmem:[%s152 + $0x50] sm:%s145]
                %195 = vst [vmem:[%s153 + $0x50] sm:%s145] %v194
                %v196 = vld [vmem:[%s152 + $0x54] sm:%s145]
                %197 = vst [vmem:[%s153 + $0x54] sm:%s145] %v196
                %v198 = vld [vmem:[%s152 + $0x58] sm:%s145]
                %199 = vst [vmem:[%s153 + $0x58] sm:%s145] %v198
                %v200 = vld [vmem:[%s152 + $0x5c] sm:%s145]
                %201 = vst [vmem:[%s153 + $0x5c] sm:%s145] %v200
                %v202 = vld [vmem:[%s152 + $0x60] sm:%s145]
                %203 = vst [vmem:[%s153 + $0x60] sm:%s145] %v202
                %v204 = vld [vmem:[%s152 + $0x64] sm:%s145]
                %205 = vst [vmem:[%s153 + $0x64] sm:%s145] %v204
                %v206 = vld [vmem:[%s152 + $0x68] sm:%s145]
                %207 = vst [vmem:[%s153 + $0x68] sm:%s145] %v206
                %v208 = vld [vmem:[%s152 + $0x6c] sm:%s145]
                %209 = vst [vmem:[%s153 + $0x6c] sm:%s145] %v208
                %v210 = vld [vmem:[%s152 + $0x70] sm:%s145]
                %211 = vst [vmem:[%s153 + $0x70] sm:%s145] %v210
                %v212 = vld [vmem:[%s152 + $0x74] sm:%s145]
                %213 = vst [vmem:[%s153 + $0x74] sm:%s145] %v212
                %v214 = vld [vmem:[%s152 + $0x78] sm:%s145]
                %215 = vst [vmem:[%s153 + $0x78] sm:%s145] %v214
                %v216 = vld [vmem:[%s152 + $0x7c] sm:%s145]
                %217 = vst [vmem:[%s153 + $0x7c] sm:%s145] %v216
                %v218 = vld [vmem:[%s152 + $0x100] sm:%s145]
                %219 = vst [vmem:[%s153 + $0x80] sm:%s145] %v218
                %v220 = vld [vmem:[%s152 + $0x104] sm:%s145]
                %221 = vst [vmem:[%s153 + $0x84] sm:%s145] %v220
                %v222 = vld [vmem:[%s152 + $0x108] sm:%s145]
                %223 = vst [vmem:[%s153 + $0x88] sm:%s145] %v222
                %v224 = vld [vmem:[%s152 + $0x10c] sm:%s145]
                %225 = vst [vmem:[%s153 + $0x8c] sm:%s145] %v224
                %v226 = vld [vmem:[%s152 + $0x110] sm:%s145]
                %227 = vst [vmem:[%s153 + $0x90] sm:%s145] %v226
                %v228 = vld [vmem:[%s152 + $0x114] sm:%s145]
                %229 = vst [vmem:[%s153 + $0x94] sm:%s145] %v228
                %v230 = vld [vmem:[%s152 + $0x118] sm:%s145]
                %231 = vst [vmem:[%s153 + $0x98] sm:%s145] %v230
                %v232 = vld [vmem:[%s152 + $0x11c] sm:%s145]
                %233 = vst [vmem:[%s153 + $0x9c] sm:%s145] %v232
                %v234 = vld [vmem:[%s152 + $0x120] sm:%s145]
                %235 = vst [vmem:[%s153 + $0xa0] sm:%s145] %v234
                %v236 = vld [vmem:[%s152 + $0x124] sm:%s145]
                %237 = vst [vmem:[%s153 + $0xa4] sm:%s145] %v236
                %v238 = vld [vmem:[%s152 + $0x128] sm:%s145]
                %239 = vst [vmem:[%s153 + $0xa8] sm:%s145] %v238
                %v240 = vld [vmem:[%s152 + $0x12c] sm:%s145]
                %241 = vst [vmem:[%s153 + $0xac] sm:%s145] %v240
                %v242 = vld [vmem:[%s152 + $0x130] sm:%s145]
                %243 = vst [vmem:[%s153 + $0xb0] sm:%s145] %v242
                %v244 = vld [vmem:[%s152 + $0x134] sm:%s145]
                %245 = vst [vmem:[%s153 + $0xb4] sm:%s145] %v244
                %v246 = vld [vmem:[%s152 + $0x138] sm:%s145]
                %247 = vst [vmem:[%s153 + $0xb8] sm:%s145] %v246
                %v248 = vld [vmem:[%s152 + $0x13c] sm:%s145]
                %249 = vst [vmem:[%s153 + $0xbc] sm:%s145] %v248
                %v250 = vld [vmem:[%s152 + $0x140] sm:%s145]
                %251 = vst [vmem:[%s153 + $0xc0] sm:%s145] %v250
                %v252 = vld [vmem:[%s152 + $0x144] sm:%s145]
                %253 = vst [vmem:[%s153 + $0xc4] sm:%s145] %v252
                %v254 = vld [vmem:[%s152 + $0x148] sm:%s145]
                %255 = vst [vmem:[%s153 + $0xc8] sm:%s145] %v254
                %v256 = vld [vmem:[%s152 + $0x14c] sm:%s145]
                %257 = vst [vmem:[%s153 + $0xcc] sm:%s145] %v256
                %v258 = vld [vmem:[%s152 + $0x150] sm:%s145]
                %259 = vst [vmem:[%s153 + $0xd0] sm:%s145] %v258
                %v260 = vld [vmem:[%s152 + $0x154] sm:%s145]
                %261 = vst [vmem:[%s153 + $0xd4] sm:%s145] %v260
                %v262 = vld [vmem:[%s152 + $0x158] sm:%s145]
                %263 = vst [vmem:[%s153 + $0xd8] sm:%s145] %v262
                %v264 = vld [vmem:[%s152 + $0x15c] sm:%s145]
                %265 = vst [vmem:[%s153 + $0xdc] sm:%s145] %v264
                %v266 = vld [vmem:[%s152 + $0x160] sm:%s145]
                %267 = vst [vmem:[%s153 + $0xe0] sm:%s145] %v266
                %v268 = vld [vmem:[%s152 + $0x164] sm:%s145]
                %269 = vst [vmem:[%s153 + $0xe4] sm:%s145] %v268
                %v270 = vld [vmem:[%s152 + $0x168] sm:%s145]
                %271 = vst [vmem:[%s153 + $0xe8] sm:%s145] %v270
                %v272 = vld [vmem:[%s152 + $0x16c] sm:%s145]
                %273 = vst [vmem:[%s153 + $0xec] sm:%s145] %v272
                %v274 = vld [vmem:[%s152 + $0x170] sm:%s145]
                %275 = vst [vmem:[%s153 + $0xf0] sm:%s145] %v274
                %v276 = vld [vmem:[%s152 + $0x174] sm:%s145]
                %277 = vst [vmem:[%s153 + $0xf4] sm:%s145] %v276
                %v278 = vld [vmem:[%s152 + $0x178] sm:%s145]
                %279 = vst [vmem:[%s153 + $0xf8] sm:%s145] %v278
                %v280 = vld [vmem:[%s152 + $0x17c] sm:%s145]
                %281 = vst [vmem:[%s153 + $0xfc] sm:%s145] %v280
                %v282 = vld [vmem:[%s152 + $0x200] sm:%s145]
                %283 = vst [vmem:[%s153 + $0x100] sm:%s145] %v282
                %v284 = vld [vmem:[%s152 + $0x204] sm:%s145]
                %285 = vst [vmem:[%s153 + $0x104] sm:%s145] %v284
                %v286 = vld [vmem:[%s152 + $0x208] sm:%s145]
                %287 = vst [vmem:[%s153 + $0x108] sm:%s145] %v286
                %v288 = vld [vmem:[%s152 + $0x20c] sm:%s145]
                %289 = vst [vmem:[%s153 + $0x10c] sm:%s145] %v288
                %v290 = vld [vmem:[%s152 + $0x210] sm:%s145]
                %291 = vst [vmem:[%s153 + $0x110] sm:%s145] %v290
                %v292 = vld [vmem:[%s152 + $0x214] sm:%s145]
                %293 = vst [vmem:[%s153 + $0x114] sm:%s145] %v292
                %v294 = vld [vmem:[%s152 + $0x218] sm:%s145]
                %295 = vst [vmem:[%s153 + $0x118] sm:%s145] %v294
                %v296 = vld [vmem:[%s152 + $0x21c] sm:%s145]
                %297 = vst [vmem:[%s153 + $0x11c] sm:%s145] %v296
                %v298 = vld [vmem:[%s152 + $0x220] sm:%s145]
                %299 = vst [vmem:[%s153 + $0x120] sm:%s145] %v298
                %v300 = vld [vmem:[%s152 + $0x224] sm:%s145]
                %301 = vst [vmem:[%s153 + $0x124] sm:%s145] %v300
                %v302 = vld [vmem:[%s152 + $0x228] sm:%s145]
                %303 = vst [vmem:[%s153 + $0x128] sm:%s145] %v302
                %v304 = vld [vmem:[%s152 + $0x22c] sm:%s145]
                %305 = vst [vmem:[%s153 + $0x12c] sm:%s145] %v304
                %v306 = vld [vmem:[%s152 + $0x230] sm:%s145]
                %307 = vst [vmem:[%s153 + $0x130] sm:%s145] %v306
                %v308 = vld [vmem:[%s152 + $0x234] sm:%s145]
                %309 = vst [vmem:[%s153 + $0x134] sm:%s145] %v308
                %v310 = vld [vmem:[%s152 + $0x238] sm:%s145]
                %311 = vst [vmem:[%s153 + $0x138] sm:%s145] %v310
                %v312 = vld [vmem:[%s152 + $0x23c] sm:%s145]
                %313 = vst [vmem:[%s153 + $0x13c] sm:%s145] %v312
                %v314 = vld [vmem:[%s152 + $0x240] sm:%s145]
                %315 = vst [vmem:[%s153 + $0x140] sm:%s145] %v314
                %v316 = vld [vmem:[%s152 + $0x244] sm:%s145]
                %317 = vst [vmem:[%s153 + $0x144] sm:%s145] %v316
                %v318 = vld [vmem:[%s152 + $0x248] sm:%s145]
                %319 = vst [vmem:[%s153 + $0x148] sm:%s145] %v318
                %v320 = vld [vmem:[%s152 + $0x24c] sm:%s145]
                %321 = vst [vmem:[%s153 + $0x14c] sm:%s145] %v320
                %v322 = vld [vmem:[%s152 + $0x250] sm:%s145]
                %323 = vst [vmem:[%s153 + $0x150] sm:%s145] %v322
                %v324 = vld [vmem:[%s152 + $0x254] sm:%s145]
                %325 = vst [vmem:[%s153 + $0x154] sm:%s145] %v324
                %v326 = vld [vmem:[%s152 + $0x258] sm:%s145]
                %327 = vst [vmem:[%s153 + $0x158] sm:%s145] %v326
                %v328 = vld [vmem:[%s152 + $0x25c] sm:%s145]
                %329 = vst [vmem:[%s153 + $0x15c] sm:%s145] %v328
                %v330 = vld [vmem:[%s152 + $0x260] sm:%s145]
                %331 = vst [vmem:[%s153 + $0x160] sm:%s145] %v330
                %v332 = vld [vmem:[%s152 + $0x264] sm:%s145]
                %333 = vst [vmem:[%s153 + $0x164] sm:%s145] %v332
                %v334 = vld [vmem:[%s152 + $0x268] sm:%s145]
                %335 = vst [vmem:[%s153 + $0x168] sm:%s145] %v334
                %v336 = vld [vmem:[%s152 + $0x26c] sm:%s145]
                %337 = vst [vmem:[%s153 + $0x16c] sm:%s145] %v336
                %v338 = vld [vmem:[%s152 + $0x270] sm:%s145]
                %339 = vst [vmem:[%s153 + $0x170] sm:%s145] %v338
                %v340 = vld [vmem:[%s152 + $0x274] sm:%s145]
                %341 = vst [vmem:[%s153 + $0x174] sm:%s145] %v340
                %v342 = vld [vmem:[%s152 + $0x278] sm:%s145]
                %343 = vst [vmem:[%s153 + $0x178] sm:%s145] %v342
                %v344 = vld [vmem:[%s152 + $0x27c] sm:%s145]
                %345 = vst [vmem:[%s153 + $0x17c] sm:%s145] %v344
                %v346 = vld [vmem:[%s152 + $0x300] sm:%s145]
                %347 = vst [vmem:[%s153 + $0x180] sm:%s145] %v346
                %v348 = vld [vmem:[%s152 + $0x304] sm:%s145]
                %349 = vst [vmem:[%s153 + $0x184] sm:%s145] %v348
                %v350 = vld [vmem:[%s152 + $0x308] sm:%s145]
                %351 = vst [vmem:[%s153 + $0x188] sm:%s145] %v350
                %v352 = vld [vmem:[%s152 + $0x30c] sm:%s145]
                %353 = vst [vmem:[%s153 + $0x18c] sm:%s145] %v352
                %v354 = vld [vmem:[%s152 + $0x310] sm:%s145]
                %355 = vst [vmem:[%s153 + $0x190] sm:%s145] %v354
                %v356 = vld [vmem:[%s152 + $0x314] sm:%s145]
                %357 = vst [vmem:[%s153 + $0x194] sm:%s145] %v356
                %v358 = vld [vmem:[%s152 + $0x318] sm:%s145]
                %359 = vst [vmem:[%s153 + $0x198] sm:%s145] %v358
                %v360 = vld [vmem:[%s152 + $0x31c] sm:%s145]
                %361 = vst [vmem:[%s153 + $0x19c] sm:%s145] %v360
                %v362 = vld [vmem:[%s152 + $0x320] sm:%s145]
                %363 = vst [vmem:[%s153 + $0x1a0] sm:%s145] %v362
                %v364 = vld [vmem:[%s152 + $0x324] sm:%s145]
                %365 = vst [vmem:[%s153 + $0x1a4] sm:%s145] %v364
                %v366 = vld [vmem:[%s152 + $0x328] sm:%s145]
                %367 = vst [vmem:[%s153 + $0x1a8] sm:%s145] %v366
                %v368 = vld [vmem:[%s152 + $0x32c] sm:%s145]
                %369 = vst [vmem:[%s153 + $0x1ac] sm:%s145] %v368
                %v370 = vld [vmem:[%s152 + $0x330] sm:%s145]
                %371 = vst [vmem:[%s153 + $0x1b0] sm:%s145] %v370
                %v372 = vld [vmem:[%s152 + $0x334] sm:%s145]
                %373 = vst [vmem:[%s153 + $0x1b4] sm:%s145] %v372
                %v374 = vld [vmem:[%s152 + $0x338] sm:%s145]
                %375 = vst [vmem:[%s153 + $0x1b8] sm:%s145] %v374
                %v376 = vld [vmem:[%s152 + $0x33c] sm:%s145]
                %377 = vst [vmem:[%s153 + $0x1bc] sm:%s145] %v376
                %v378 = vld [vmem:[%s152 + $0x340] sm:%s145]
                %379 = vst [vmem:[%s153 + $0x1c0] sm:%s145] %v378
                %v380 = vld [vmem:[%s152 + $0x344] sm:%s145]
                %381 = vst [vmem:[%s153 + $0x1c4] sm:%s145] %v380
                %v382 = vld [vmem:[%s152 + $0x348] sm:%s145]
                %383 = vst [vmem:[%s153 + $0x1c8] sm:%s145] %v382
                %v384 = vld [vmem:[%s152 + $0x34c] sm:%s145]
                %385 = vst [vmem:[%s153 + $0x1cc] sm:%s145] %v384
                %v386 = vld [vmem:[%s152 + $0x350] sm:%s145]
                %387 = vst [vmem:[%s153 + $0x1d0] sm:%s145] %v386
                %v388 = vld [vmem:[%s152 + $0x354] sm:%s145]
                %389 = vst [vmem:[%s153 + $0x1d4] sm:%s145] %v388
                %v390 = vld [vmem:[%s152 + $0x358] sm:%s145]
                %391 = vst [vmem:[%s153 + $0x1d8] sm:%s145] %v390
                %v392 = vld [vmem:[%s152 + $0x35c] sm:%s145]
                %393 = vst [vmem:[%s153 + $0x1dc] sm:%s145] %v392
                %v394 = vld [vmem:[%s152 + $0x360] sm:%s145]
                %395 = vst [vmem:[%s153 + $0x1e0] sm:%s145] %v394
                %v396 = vld [vmem:[%s152 + $0x364] sm:%s145]
                %397 = vst [vmem:[%s153 + $0x1e4] sm:%s145] %v396
                %v398 = vld [vmem:[%s152 + $0x368] sm:%s145]
                %399 = vst [vmem:[%s153 + $0x1e8] sm:%s145] %v398
                %v400 = vld [vmem:[%s152 + $0x36c] sm:%s145]
                %401 = vst [vmem:[%s153 + $0x1ec] sm:%s145] %v400
                %v402 = vld [vmem:[%s152 + $0x370] sm:%s145]
                %403 = vst [vmem:[%s153 + $0x1f0] sm:%s145] %v402
                %v404 = vld [vmem:[%s152 + $0x374] sm:%s145]
                %405 = vst [vmem:[%s153 + $0x1f4] sm:%s145] %v404
                %v406 = vld [vmem:[%s152 + $0x378] sm:%s145]
                %407 = vst [vmem:[%s153 + $0x1f8] sm:%s145] %v406
                %v408 = vld [vmem:[%s152 + $0x37c] sm:%s145]
                %409 = vst [vmem:[%s153 + $0x1fc] sm:%s145] %v408
              $region45: #{net1_forward.3} parent=39 // loop_footer
                %s151 = sadd.s32 1, %s147
              $region46: #{net1_forward.3} parent=39 // loop_footer_branch
                %146 = sbr.rel target = $region42
              $region47: #{net1_forward.3} parent=39 // loop_exit
                _
            $region40: #{net1_forward.3} parent=31 // pred_fallthru
              _
          $region32: #{net1_forward.3} parent=27 // pred_fallthru
            _
          %686 = vnop
        $region28: #{net1_forward.3} parent=23 // pred_fallthru
          _
      $region24: #{net1_forward.3} parent=5 // pred_fallthru
        _
      %p687 = scmp.le.s32.totalorder 1, %s9
      %p688 = scmp.lt.s32.totalorder %s9, 3
      %p689 = pnand %p687, %p688
      %p690 = pneg %p689
      // Predicated region
      $region66: #{net1_forward.3} parent=5 // pred_check
        _
      $region67: #{net1_forward.3} parent=5 // pred_check_branch
        %692 = sbr.rel (%p689) target = $region69
      $region68: #{net1_forward.3} parent=5 // pred_region
        %s693 = ssub.s32 %s9, 1
        %s694 = sand.u32 %s22, 1
        %s695 = sand.u32 %s22, 1
        %s696 = smul.addr %s695, 512
        %s697 = scalar_lea.vmem [#allocation2], %s696
        // Predicated region
        $region70: #{net1_forward.3} parent=68 // pred_check
          %p698 = pneg %p35
        $region71: #{net1_forward.3} parent=68 // pred_check_branch
          %700 = sbr.rel (%p698) target = $region73
        $region72: #{net1_forward.3} parent=68 // pred_region
          _
        $region73: #{net1_forward.3} parent=68 // pred_fallthru
          _
        %s701 = sand.u32 %s22, 1
        %s702 = sand.u32 %s22, 1
        %s703 = smul.addr %s702, 512
        %s704 = scalar_lea.vmem [#allocation2], %s703
        %p705 = pneg %p35
        %p706 = pneg %p32
        %p707 = pneg %p56
        %p708 = pneg %p53
        %p709 = pneg %p77
        %p710 = pneg %p74
        %p711 = pneg %p103
        %p712 = pneg %p100
        %s713 = smul.u32 32, %s14
        %p714 = scmp.lt.s32.totalorder %s713, 63
        %s715 = scalar_select %p714, %s713, 63
        %s716 = smul.addr %s715, 4
        %s717 = scalar_lea.vmem %s3, %s716
        %s718 = smul.u32 32, %s14
        %s719 = smul.u32 32, %s14
        %p720 = scmp.lt.s32.totalorder %s719, 63
        %s721 = scalar_select %p720, %s719, 63
        %s722 = smul.addr %s721, 4
        %s723 = scalar_lea.vmem %s3, %s722
        %s724 = smul.u32 32, %s14
        %v726 = vld [vmem:[%s697] sm:$0xf]
        %v727 = vld [vmem:[%s697 + $0x4] sm:$0xf]
        %v728 = vld [vmem:[%s697 + $0x8] sm:$0xf]
        %v729 = vld [vmem:[%s697 + $0xc] sm:$0xf]
        %v730 = vld [vmem:[%s697 + $0x10] sm:$0xf]
        %v731 = vld [vmem:[%s697 + $0x14] sm:$0xf]
        %v732 = vld [vmem:[%s697 + $0x18] sm:$0xf]
        %v733 = vld [vmem:[%s697 + $0x1c] sm:$0xf]
        %v734 = vld [vmem:[%s697 + $0x20] sm:$0xf]
        %v735 = vld [vmem:[%s697 + $0x24] sm:$0xf]
        %v736 = vld [vmem:[%s697 + $0x28] sm:$0xf]
        %v737 = vld [vmem:[%s697 + $0x2c] sm:$0xf]
        %v738 = vld [vmem:[%s697 + $0x30] sm:$0xf]
        %v739 = vld [vmem:[%s697 + $0x34] sm:$0xf]
        %v740 = vld [vmem:[%s697 + $0x38] sm:$0xf]
        %v741 = vld [vmem:[%s697 + $0x3c] sm:$0xf]
        %v742 = vld [vmem:[%s697 + $0x40] sm:$0xf]
        %v743 = vld [vmem:[%s697 + $0x44] sm:$0xf]
        %v744 = vld [vmem:[%s697 + $0x48] sm:$0xf]
        %v745 = vld [vmem:[%s697 + $0x4c] sm:$0xf]
        %v746 = vld [vmem:[%s697 + $0x50] sm:$0xf]
        %v747 = vld [vmem:[%s697 + $0x54] sm:$0xf]
        %v748 = vld [vmem:[%s697 + $0x58] sm:$0xf]
        %v749 = vld [vmem:[%s697 + $0x5c] sm:$0xf]
        %v750 = vld [vmem:[%s697 + $0x60] sm:$0xf]
        %v751 = vld [vmem:[%s697 + $0x64] sm:$0xf]
        %v752 = vld [vmem:[%s697 + $0x68] sm:$0xf]
        %v753 = vld [vmem:[%s697 + $0x6c] sm:$0xf]
        %v754 = vld [vmem:[%s697 + $0x70] sm:$0xf]
        %v755 = vld [vmem:[%s697 + $0x74] sm:$0xf]
        %v756 = vld [vmem:[%s697 + $0x78] sm:$0xf]
        %v757 = vld [vmem:[%s697 + $0x7c] sm:$0xf]
        %v758 = vld [vmem:[%s697 + $0x80] sm:$0xf]
        %v759 = vld [vmem:[%s697 + $0x84] sm:$0xf]
        %v760 = vld [vmem:[%s697 + $0x88] sm:$0xf]
        %v761 = vld [vmem:[%s697 + $0x8c] sm:$0xf]
        %v762 = vld [vmem:[%s697 + $0x90] sm:$0xf]
        %v763 = vld [vmem:[%s697 + $0x94] sm:$0xf]
        %v764 = vld [vmem:[%s697 + $0x98] sm:$0xf]
        %v765 = vld [vmem:[%s697 + $0x9c] sm:$0xf]
        %v766 = vld [vmem:[%s697 + $0xa0] sm:$0xf]
        %v767 = vld [vmem:[%s697 + $0xa4] sm:$0xf]
        %v768 = vld [vmem:[%s697 + $0xa8] sm:$0xf]
        %v769 = vld [vmem:[%s697 + $0xac] sm:$0xf]
        %v770 = vld [vmem:[%s697 + $0xb0] sm:$0xf]
        %v771 = vld [vmem:[%s697 + $0xb4] sm:$0xf]
        %v772 = vld [vmem:[%s697 + $0xb8] sm:$0xf]
        %v773 = vld [vmem:[%s697 + $0xbc] sm:$0xf]
        %v774 = vld [vmem:[%s697 + $0xc0] sm:$0xf]
        %v775 = vld [vmem:[%s697 + $0xc4] sm:$0xf]
        %v776 = vld [vmem:[%s697 + $0xc8] sm:$0xf]
        %v777 = vld [vmem:[%s697 + $0xcc] sm:$0xf]
        %v778 = vld [vmem:[%s697 + $0xd0] sm:$0xf]
        %v779 = vld [vmem:[%s697 + $0xd4] sm:$0xf]
        %v780 = vld [vmem:[%s697 + $0xd8] sm:$0xf]
        %v781 = vld [vmem:[%s697 + $0xdc] sm:$0xf]
        %v782 = vld [vmem:[%s697 + $0xe0] sm:$0xf]
        %v783 = vld [vmem:[%s697 + $0xe4] sm:$0xf]
        %v784 = vld [vmem:[%s697 + $0xe8] sm:$0xf]
        %v785 = vld [vmem:[%s697 + $0xec] sm:$0xf]
        %v786 = vld [vmem:[%s697 + $0xf0] sm:$0xf]
        %v787 = vld [vmem:[%s697 + $0xf4] sm:$0xf]
        %v788 = vld [vmem:[%s697 + $0xf8] sm:$0xf]
        %v789 = vld [vmem:[%s697 + $0xfc] sm:$0xf]
        %v790 = vld [vmem:[%s697 + $0x100] sm:$0xf]
        %v791 = vld [vmem:[%s697 + $0x104] sm:$0xf]
        %v792 = vld [vmem:[%s697 + $0x108] sm:$0xf]
        %v793 = vld [vmem:[%s697 + $0x10c] sm:$0xf]
        %v794 = vld [vmem:[%s697 + $0x110] sm:$0xf]
        %v795 = vld [vmem:[%s697 + $0x114] sm:$0xf]
        %v796 = vld [vmem:[%s697 + $0x118] sm:$0xf]
        %v797 = vld [vmem:[%s697 + $0x11c] sm:$0xf]
        %v798 = vld [vmem:[%s697 + $0x120] sm:$0xf]
        %v799 = vld [vmem:[%s697 + $0x124] sm:$0xf]
        %v800 = vld [vmem:[%s697 + $0x128] sm:$0xf]
        %v801 = vld [vmem:[%s697 + $0x12c] sm:$0xf]
        %v802 = vld [vmem:[%s697 + $0x130] sm:$0xf]
        %v803 = vld [vmem:[%s697 + $0x134] sm:$0xf]
        %v804 = vld [vmem:[%s697 + $0x138] sm:$0xf]
        %v805 = vld [vmem:[%s697 + $0x13c] sm:$0xf]
        %v806 = vld [vmem:[%s697 + $0x140] sm:$0xf]
        %v807 = vld [vmem:[%s697 + $0x144] sm:$0xf]
        %v808 = vld [vmem:[%s697 + $0x148] sm:$0xf]
        %v809 = vld [vmem:[%s697 + $0x14c] sm:$0xf]
        %v810 = vld [vmem:[%s697 + $0x150] sm:$0xf]
        %v811 = vld [vmem:[%s697 + $0x154] sm:$0xf]
        %v812 = vld [vmem:[%s697 + $0x158] sm:$0xf]
        %v813 = vld [vmem:[%s697 + $0x15c] sm:$0xf]
        %v814 = vld [vmem:[%s697 + $0x160] sm:$0xf]
        %v815 = vld [vmem:[%s697 + $0x164] sm:$0xf]
        %v816 = vld [vmem:[%s697 + $0x168] sm:$0xf]
        %v817 = vld [vmem:[%s697 + $0x16c] sm:$0xf]
        %v818 = vld [vmem:[%s697 + $0x170] sm:$0xf]
        %v819 = vld [vmem:[%s697 + $0x174] sm:$0xf]
        %v820 = vld [vmem:[%s697 + $0x178] sm:$0xf]
        %v821 = vld [vmem:[%s697 + $0x17c] sm:$0xf]
        %v822 = vld [vmem:[%s697 + $0x180] sm:$0xf]
        %v823 = vld [vmem:[%s697 + $0x184] sm:$0xf]
        %v824 = vld [vmem:[%s697 + $0x188] sm:$0xf]
        %v825 = vld [vmem:[%s697 + $0x18c] sm:$0xf]
        %v826 = vld [vmem:[%s697 + $0x190] sm:$0xf]
        %v827 = vld [vmem:[%s697 + $0x194] sm:$0xf]
        %v828 = vld [vmem:[%s697 + $0x198] sm:$0xf]
        %v829 = vld [vmem:[%s697 + $0x19c] sm:$0xf]
        %v830 = vld [vmem:[%s697 + $0x1a0] sm:$0xf]
        %v831 = vld [vmem:[%s697 + $0x1a4] sm:$0xf]
        %v832 = vld [vmem:[%s697 + $0x1a8] sm:$0xf]
        %v833 = vld [vmem:[%s697 + $0x1ac] sm:$0xf]
        %v834 = vld [vmem:[%s697 + $0x1b0] sm:$0xf]
        %v835 = vld [vmem:[%s697 + $0x1b4] sm:$0xf]
        %v836 = vld [vmem:[%s697 + $0x1b8] sm:$0xf]
        %v837 = vld [vmem:[%s697 + $0x1bc] sm:$0xf]
        %v838 = vld [vmem:[%s697 + $0x1c0] sm:$0xf]
        %v839 = vld [vmem:[%s697 + $0x1c4] sm:$0xf]
        %v840 = vld [vmem:[%s697 + $0x1c8] sm:$0xf]
        %v841 = vld [vmem:[%s697 + $0x1cc] sm:$0xf]
        %v842 = vld [vmem:[%s697 + $0x1d0] sm:$0xf]
        %v843 = vld [vmem:[%s697 + $0x1d4] sm:$0xf]
        %v844 = vld [vmem:[%s697 + $0x1d8] sm:$0xf]
        %v845 = vld [vmem:[%s697 + $0x1dc] sm:$0xf]
        %v846 = vld [vmem:[%s697 + $0x1e0] sm:$0xf]
        %v847 = vld [vmem:[%s697 + $0x1e4] sm:$0xf]
        %v848 = vld [vmem:[%s697 + $0x1e8] sm:$0xf]
        %v849 = vld [vmem:[%s697 + $0x1ec] sm:$0xf]
        %v850 = vld [vmem:[%s697 + $0x1f0] sm:$0xf]
        %v851 = vld [vmem:[%s697 + $0x1f4] sm:$0xf]
        %v852 = vld [vmem:[%s697 + $0x1f8] sm:$0xf]
        %v853 = vld [vmem:[%s697 + $0x1fc] sm:$0xf]
        %v854 = vld [vmem:[%s1] sm:$0xf]
        %v855 = vld [vmem:[%s1 + $0x4] sm:$0xf]
        %v856 = vld [vmem:[%s1 + $0x8] sm:$0xf]
        %v857 = vld [vmem:[%s1 + $0xc] sm:$0x1]
        %v986 = vunpack.c.l.b16 %v726
        %v987 = vunpack.c.l.b16 %v727
        %v988 = vunpack.c.l.b16 %v728
        %v989 = vunpack.c.l.b16 %v729
        %v990 = vunpack.c.l.b16 %v730
        %v991 = vunpack.c.l.b16 %v731
        %v992 = vunpack.c.l.b16 %v732
        %v993 = vunpack.c.l.b16 %v733
        %v994 = vunpack.c.l.b16 %v734
        %v995 = vunpack.c.l.b16 %v735
        %v996 = vunpack.c.l.b16 %v736
        %v997 = vunpack.c.l.b16 %v737
        %v998 = vunpack.c.l.b16 %v738
        %v999 = vunpack.c.l.b16 %v739
        %v1000 = vunpack.c.l.b16 %v740
        %v1001 = vunpack.c.l.b16 %v741
        %v1002 = vunpack.c.l.b16 %v742
        %v1003 = vunpack.c.l.b16 %v743
        %v1004 = vunpack.c.l.b16 %v744
        %v1005 = vunpack.c.l.b16 %v745
        %v1006 = vunpack.c.l.b16 %v746
        %v1007 = vunpack.c.l.b16 %v747
        %v1008 = vunpack.c.l.b16 %v748
        %v1009 = vunpack.c.l.b16 %v749
        %v1010 = vunpack.c.l.b16 %v750
        %v1011 = vunpack.c.l.b16 %v751
        %v1012 = vunpack.c.l.b16 %v752
        %v1013 = vunpack.c.l.b16 %v753
        %v1014 = vunpack.c.l.b16 %v754
        %v1015 = vunpack.c.l.b16 %v755
        %v1016 = vunpack.c.l.b16 %v756
        %v1017 = vunpack.c.l.b16 %v757
        %v1018 = vunpack.c.l.b16 %v758
        %v1019 = vunpack.c.l.b16 %v759
        %v1020 = vunpack.c.l.b16 %v760
        %v1021 = vunpack.c.l.b16 %v761
        %v1022 = vunpack.c.l.b16 %v762
        %v1023 = vunpack.c.l.b16 %v763
        %v1024 = vunpack.c.l.b16 %v764
        %v1025 = vunpack.c.l.b16 %v765
        %v1026 = vunpack.c.l.b16 %v766
        %v1027 = vunpack.c.l.b16 %v767
        %v1028 = vunpack.c.l.b16 %v768
        %v1029 = vunpack.c.l.b16 %v769
        %v1030 = vunpack.c.l.b16 %v770
        %v1031 = vunpack.c.l.b16 %v771
        %v1032 = vunpack.c.l.b16 %v772
        %v1033 = vunpack.c.l.b16 %v773
        %v1034 = vunpack.c.l.b16 %v774
        %v1035 = vunpack.c.l.b16 %v775
        %v1036 = vunpack.c.l.b16 %v776
        %v1037 = vunpack.c.l.b16 %v777
        %v1038 = vunpack.c.l.b16 %v778
        %v1039 = vunpack.c.l.b16 %v779
        %v1040 = vunpack.c.l.b16 %v780
        %v1041 = vunpack.c.l.b16 %v781
        %v1042 = vunpack.c.l.b16 %v782
        %v1043 = vunpack.c.l.b16 %v783
        %v1044 = vunpack.c.l.b16 %v784
        %v1045 = vunpack.c.l.b16 %v785
        %v1046 = vunpack.c.l.b16 %v786
        %v1047 = vunpack.c.l.b16 %v787
        %v1048 = vunpack.c.l.b16 %v788
        %v1049 = vunpack.c.l.b16 %v789
        %v1050 = vunpack.c.l.b16 %v790
        %v1051 = vunpack.c.l.b16 %v791
        %v1052 = vunpack.c.l.b16 %v792
        %v1053 = vunpack.c.l.b16 %v793
        %v1054 = vunpack.c.l.b16 %v794
        %v1055 = vunpack.c.l.b16 %v795
        %v1056 = vunpack.c.l.b16 %v796
        %v1057 = vunpack.c.l.b16 %v797
        %v1058 = vunpack.c.l.b16 %v798
        %v1059 = vunpack.c.l.b16 %v799
        %v1060 = vunpack.c.l.b16 %v800
        %v1061 = vunpack.c.l.b16 %v801
        %v1062 = vunpack.c.l.b16 %v802
        %v1063 = vunpack.c.l.b16 %v803
        %v1064 = vunpack.c.l.b16 %v804
        %v1065 = vunpack.c.l.b16 %v805
        %v1066 = vunpack.c.l.b16 %v806
        %v1067 = vunpack.c.l.b16 %v807
        %v1068 = vunpack.c.l.b16 %v808
        %v1069 = vunpack.c.l.b16 %v809
        %v1070 = vunpack.c.l.b16 %v810
        %v1071 = vunpack.c.l.b16 %v811
        %v1072 = vunpack.c.l.b16 %v812
        %v1073 = vunpack.c.l.b16 %v813
        %v1074 = vunpack.c.l.b16 %v814
        %v1075 = vunpack.c.l.b16 %v815
        %v1076 = vunpack.c.l.b16 %v816
        %v1077 = vunpack.c.l.b16 %v817
        %v1078 = vunpack.c.l.b16 %v818
        %v1079 = vunpack.c.l.b16 %v819
        %v1080 = vunpack.c.l.b16 %v820
        %v1081 = vunpack.c.l.b16 %v821
        %v1082 = vunpack.c.l.b16 %v822
        %v1083 = vunpack.c.l.b16 %v823
        %v1084 = vunpack.c.l.b16 %v824
        %v1085 = vunpack.c.l.b16 %v825
        %v1086 = vunpack.c.l.b16 %v826
        %v1087 = vunpack.c.l.b16 %v827
        %v1088 = vunpack.c.l.b16 %v828
        %v1089 = vunpack.c.l.b16 %v829
        %v1090 = vunpack.c.l.b16 %v830
        %v1091 = vunpack.c.l.b16 %v831
        %v1092 = vunpack.c.l.b16 %v832
        %v1093 = vunpack.c.l.b16 %v833
        %v1094 = vunpack.c.l.b16 %v834
        %v1095 = vunpack.c.l.b16 %v835
        %v1096 = vunpack.c.l.b16 %v836
        %v1097 = vunpack.c.l.b16 %v837
        %v1098 = vunpack.c.l.b16 %v838
        %v1099 = vunpack.c.l.b16 %v839
        %v1100 = vunpack.c.l.b16 %v840
        %v1101 = vunpack.c.l.b16 %v841
        %v1102 = vunpack.c.l.b16 %v842
        %v1103 = vunpack.c.l.b16 %v843
        %v1104 = vunpack.c.l.b16 %v844
        %v1105 = vunpack.c.l.b16 %v845
        %v1106 = vunpack.c.l.b16 %v846
        %v1107 = vunpack.c.l.b16 %v847
        %v1108 = vunpack.c.l.b16 %v848
        %v1109 = vunpack.c.l.b16 %v849
        %v1110 = vunpack.c.l.b16 %v850
        %v1111 = vunpack.c.l.b16 %v851
        %v1112 = vunpack.c.l.b16 %v852
        %v1113 = vunpack.c.l.b16 %v853
        %v1114 = vpack.c.b16 %v987, %v986
        %v1115 = vpack.c.b16 %v989, %v988
        %v1116 = vpack.c.b16 %v991, %v990
        %v1117 = vpack.c.b16 %v993, %v992
        %v1118 = vpack.c.b16 %v995, %v994
        %v1119 = vpack.c.b16 %v997, %v996
        %v1120 = vpack.c.b16 %v999, %v998
        %v1121 = vpack.c.b16 %v1001, %v1000
        %v1122 = vpack.c.b16 %v1003, %v1002
        %v1123 = vpack.c.b16 %v1005, %v1004
        %v1124 = vpack.c.b16 %v1007, %v1006
        %v1125 = vpack.c.b16 %v1009, %v1008
        %v1126 = vpack.c.b16 %v1011, %v1010
        %v1127 = vpack.c.b16 %v1013, %v1012
        %v1128 = vpack.c.b16 %v1015, %v1014
        %v1129 = vpack.c.b16 %v1017, %v1016
        %v1130 = vpack.c.b16 %v1019, %v1018
        %v1131 = vpack.c.b16 %v1021, %v1020
        %v1132 = vpack.c.b16 %v1023, %v1022
        %v1133 = vpack.c.b16 %v1025, %v1024
        %v1134 = vpack.c.b16 %v1027, %v1026
        %v1135 = vpack.c.b16 %v1029, %v1028
        %v1136 = vpack.c.b16 %v1031, %v1030
        %v1137 = vpack.c.b16 %v1033, %v1032
        %v1138 = vpack.c.b16 %v1035, %v1034
        %v1139 = vpack.c.b16 %v1037, %v1036
        %v1140 = vpack.c.b16 %v1039, %v1038
        %v1141 = vpack.c.b16 %v1041, %v1040
        %v1142 = vpack.c.b16 %v1043, %v1042
        %v1143 = vpack.c.b16 %v1045, %v1044
        %v1144 = vpack.c.b16 %v1047, %v1046
        %v1145 = vpack.c.b16 %v1049, %v1048
        %v1146 = vpack.c.b16 %v1051, %v1050
        %v1147 = vpack.c.b16 %v1053, %v1052
        %v1148 = vpack.c.b16 %v1055, %v1054
        %v1149 = vpack.c.b16 %v1057, %v1056
        %v1150 = vpack.c.b16 %v1059, %v1058
        %v1151 = vpack.c.b16 %v1061, %v1060
        %v1152 = vpack.c.b16 %v1063, %v1062
        %v1153 = vpack.c.b16 %v1065, %v1064
        %v1154 = vpack.c.b16 %v1067, %v1066
        %v1155 = vpack.c.b16 %v1069, %v1068
        %v1156 = vpack.c.b16 %v1071, %v1070
        %v1157 = vpack.c.b16 %v1073, %v1072
        %v1158 = vpack.c.b16 %v1075, %v1074
        %v1159 = vpack.c.b16 %v1077, %v1076
        %v1160 = vpack.c.b16 %v1079, %v1078
        %v1161 = vpack.c.b16 %v1081, %v1080
        %v1162 = vpack.c.b16 %v1083, %v1082
        %v1163 = vpack.c.b16 %v1085, %v1084
        %v1164 = vpack.c.b16 %v1087, %v1086
        %v1165 = vpack.c.b16 %v1089, %v1088
        %v1166 = vpack.c.b16 %v1091, %v1090
        %v1167 = vpack.c.b16 %v1093, %v1092
        %v1168 = vpack.c.b16 %v1095, %v1094
        %v1169 = vpack.c.b16 %v1097, %v1096
        %v1170 = vpack.c.b16 %v1099, %v1098
        %v1171 = vpack.c.b16 %v1101, %v1100
        %v1172 = vpack.c.b16 %v1103, %v1102
        %v1173 = vpack.c.b16 %v1105, %v1104
        %v1174 = vpack.c.b16 %v1107, %v1106
        %v1175 = vpack.c.b16 %v1109, %v1108
        %v1176 = vpack.c.b16 %v1111, %v1110
        %v1177 = vpack.c.b16 %v1113, %v1112
        %v1182 = vunpack.c.l.b16 %v854
        %v1183 = vunpack.c.l.b16 %v855
        %v1184 = vunpack.c.l.b16 %v856
        %v1185 = vunpack.c.l.b16 %v857
        %v1186 = vpack.c.b16 %v1183, %v1182
        %v1187 = vpack.c.b16 %v1185, %v1184
        %vm1189 = vcmask 203776
        %v1191 = vsel %vm1189, %v1114, 0
        %v1194 = vsel %vm1189, %v1115, 0
        %v1197 = vsel %vm1189, %v1116, 0
        %v1200 = vsel %vm1189, %v1117, 0
        %v1203 = vsel %vm1189, %v1118, 0
        %v1206 = vsel %vm1189, %v1119, 0
        %v1209 = vsel %vm1189, %v1120, 0
        %v1212 = vsel %vm1189, %v1121, 0
        %v1215 = vsel %vm1189, %v1122, 0
        %v1218 = vsel %vm1189, %v1123, 0
        %v1221 = vsel %vm1189, %v1124, 0
        %v1224 = vsel %vm1189, %v1125, 0
        %v1227 = vsel %vm1189, %v1126, 0
        %v1230 = vsel %vm1189, %v1127, 0
        %v1233 = vsel %vm1189, %v1128, 0
        %v1236 = vsel %vm1189, %v1129, 0
        %v1239 = vsel %vm1189, %v1130, 0
        %v1242 = vsel %vm1189, %v1131, 0
        %v1245 = vsel %vm1189, %v1132, 0
        %v1248 = vsel %vm1189, %v1133, 0
        %v1251 = vsel %vm1189, %v1134, 0
        %v1254 = vsel %vm1189, %v1135, 0
        %v1257 = vsel %vm1189, %v1136, 0
        %v1260 = vsel %vm1189, %v1137, 0
        %v1263 = vsel %vm1189, %v1138, 0
        %v1266 = vsel %vm1189, %v1139, 0
        %v1269 = vsel %vm1189, %v1140, 0
        %v1272 = vsel %vm1189, %v1141, 0
        %v1275 = vsel %vm1189, %v1142, 0
        %v1278 = vsel %vm1189, %v1143, 0
        %v1281 = vsel %vm1189, %v1144, 0
        %v1284 = vsel %vm1189, %v1145, 0
        %v1287 = vsel %vm1189, %v1146, 0
        %v1290 = vsel %vm1189, %v1147, 0
        %v1293 = vsel %vm1189, %v1148, 0
        %v1296 = vsel %vm1189, %v1149, 0
        %v1299 = vsel %vm1189, %v1150, 0
        %v1302 = vsel %vm1189, %v1151, 0
        %v1305 = vsel %vm1189, %v1152, 0
        %v1308 = vsel %vm1189, %v1153, 0
        %v1311 = vsel %vm1189, %v1154, 0
        %v1314 = vsel %vm1189, %v1155, 0
        %v1317 = vsel %vm1189, %v1156, 0
        %v1320 = vsel %vm1189, %v1157, 0
        %v1323 = vsel %vm1189, %v1158, 0
        %v1326 = vsel %vm1189, %v1159, 0
        %v1329 = vsel %vm1189, %v1160, 0
        %v1332 = vsel %vm1189, %v1161, 0
        %v1335 = vsel %vm1189, %v1162, 0
        %v1338 = vsel %vm1189, %v1163, 0
        %v1341 = vsel %vm1189, %v1164, 0
        %v1344 = vsel %vm1189, %v1165, 0
        %v1347 = vsel %vm1189, %v1166, 0
        %v1350 = vsel %vm1189, %v1167, 0
        %v1353 = vsel %vm1189, %v1168, 0
        %v1356 = vsel %vm1189, %v1169, 0
        %v1359 = vsel %vm1189, %v1170, 0
        %v1362 = vsel %vm1189, %v1171, 0
        %v1365 = vsel %vm1189, %v1172, 0
        %v1368 = vsel %vm1189, %v1173, 0
        %v1371 = vsel %vm1189, %v1174, 0
        %v1374 = vsel %vm1189, %v1175, 0
        %v1377 = vsel %vm1189, %v1176, 0
        %v1380 = vsel %vm1189, %v1177, 0
        %vm1382 = vcmask 1043456
        %vm1383 = vcmask 1044480
        %v1384 = vsel %vm1382, 4294967295, 65535
        %v1385 = vsel %vm1383, %v1384, 0
        %v1387 = vand.u32 %v1187, %v1385
        %1389 = vmatpush.bf16.msra.mxu0 0
        %1390 = vmatpush.bf16.msra.mxu0 0
        %1391 = vmatpush.bf16.msra.mxu0 0
        %1392 = vmatpush.bf16.msra.mxu0 0
        %1393 = vmatpush.bf16.msra.mxu0 0
        %1394 = vmatpush.bf16.msra.mxu0 0
        %1395 = vmatpush.bf16.msra.mxu0 %v1387
        %1396 = vmatpush.bf16.msra.mxu0 %v1186
        %1397 = vmatmul.bf16.gmra.mxu0 %v1191
        %v1398 = vpop.f32.mrf.mxu0
        %v1399 = vadd.f32 0.0, %v1398
        %v1400 = vpop.f32.mrf.mxu0
        %v1401 = vadd.f32 0.0, %v1400
        %1402 = vmatmul.bf16.gmra.mxu0 %v1194
        %v1403 = vpop.f32.mrf.mxu0
        %v1404 = vadd.f32 0.0, %v1403
        %v1405 = vpop.f32.mrf.mxu0
        %v1406 = vadd.f32 0.0, %v1405
        %1407 = vmatmul.bf16.gmra.mxu0 %v1197
        %v1408 = vpop.f32.mrf.mxu0
        %v1409 = vadd.f32 0.0, %v1408
        %v1410 = vpop.f32.mrf.mxu0
        %v1411 = vadd.f32 0.0, %v1410
        %1412 = vmatmul.bf16.gmra.mxu0 %v1200
        %v1413 = vpop.f32.mrf.mxu0
        %v1414 = vadd.f32 0.0, %v1413
        %v1415 = vpop.f32.mrf.mxu0
        %v1416 = vadd.f32 0.0, %v1415
        %1417 = vmatmul.bf16.gmra.mxu0 %v1203
        %v1418 = vpop.f32.mrf.mxu0
        %v1419 = vadd.f32 0.0, %v1418
        %v1420 = vpop.f32.mrf.mxu0
        %v1421 = vadd.f32 0.0, %v1420
        %1422 = vmatmul.bf16.gmra.mxu0 %v1206
        %v1423 = vpop.f32.mrf.mxu0
        %v1424 = vadd.f32 0.0, %v1423
        %v1425 = vpop.f32.mrf.mxu0
        %v1426 = vadd.f32 0.0, %v1425
        %1427 = vmatmul.bf16.gmra.mxu0 %v1209
        %v1428 = vpop.f32.mrf.mxu0
        %v1429 = vadd.f32 0.0, %v1428
        %v1430 = vpop.f32.mrf.mxu0
        %v1431 = vadd.f32 0.0, %v1430
        %1432 = vmatmul.bf16.gmra.mxu0 %v1212
        %v1433 = vpop.f32.mrf.mxu0
        %v1434 = vadd.f32 0.0, %v1433
        %v1435 = vpop.f32.mrf.mxu0
        %v1436 = vadd.f32 0.0, %v1435
        %1437 = vmatmul.bf16.gmra.mxu0 %v1215
        %v1438 = vpop.f32.mrf.mxu0
        %v1439 = vadd.f32 0.0, %v1438
        %v1440 = vpop.f32.mrf.mxu0
        %v1441 = vadd.f32 0.0, %v1440
        %1442 = vmatmul.bf16.gmra.mxu0 %v1218
        %v1443 = vpop.f32.mrf.mxu0
        %v1444 = vadd.f32 0.0, %v1443
        %v1445 = vpop.f32.mrf.mxu0
        %v1446 = vadd.f32 0.0, %v1445
        %1447 = vmatmul.bf16.gmra.mxu0 %v1221
        %v1448 = vpop.f32.mrf.mxu0
        %v1449 = vadd.f32 0.0, %v1448
        %v1450 = vpop.f32.mrf.mxu0
        %v1451 = vadd.f32 0.0, %v1450
        %1452 = vmatmul.bf16.gmra.mxu0 %v1224
        %v1453 = vpop.f32.mrf.mxu0
        %v1454 = vadd.f32 0.0, %v1453
        %v1455 = vpop.f32.mrf.mxu0
        %v1456 = vadd.f32 0.0, %v1455
        %1457 = vmatmul.bf16.gmra.mxu0 %v1227
        %v1458 = vpop.f32.mrf.mxu0
        %v1459 = vadd.f32 0.0, %v1458
        %v1460 = vpop.f32.mrf.mxu0
        %v1461 = vadd.f32 0.0, %v1460
        %1462 = vmatmul.bf16.gmra.mxu0 %v1230
        %v1463 = vpop.f32.mrf.mxu0
        %v1464 = vadd.f32 0.0, %v1463
        %v1465 = vpop.f32.mrf.mxu0
        %v1466 = vadd.f32 0.0, %v1465
        %1467 = vmatmul.bf16.gmra.mxu0 %v1233
        %v1468 = vpop.f32.mrf.mxu0
        %v1469 = vadd.f32 0.0, %v1468
        %v1470 = vpop.f32.mrf.mxu0
        %v1471 = vadd.f32 0.0, %v1470
        %1472 = vmatmul.bf16.gmra.mxu0 %v1236
        %v1473 = vpop.f32.mrf.mxu0
        %v1474 = vadd.f32 0.0, %v1473
        %v1475 = vpop.f32.mrf.mxu0
        %v1476 = vadd.f32 0.0, %v1475
        %1477 = vmatmul.bf16.gmra.mxu0 %v1239
        %v1478 = vpop.f32.mrf.mxu0
        %v1479 = vadd.f32 0.0, %v1478
        %v1480 = vpop.f32.mrf.mxu0
        %v1481 = vadd.f32 0.0, %v1480
        %1482 = vmatmul.bf16.gmra.mxu0 %v1242
        %v1483 = vpop.f32.mrf.mxu0
        %v1484 = vadd.f32 0.0, %v1483
        %v1485 = vpop.f32.mrf.mxu0
        %v1486 = vadd.f32 0.0, %v1485
        %1487 = vmatmul.bf16.gmra.mxu0 %v1245
        %v1488 = vpop.f32.mrf.mxu0
        %v1489 = vadd.f32 0.0, %v1488
        %v1490 = vpop.f32.mrf.mxu0
        %v1491 = vadd.f32 0.0, %v1490
        %1492 = vmatmul.bf16.gmra.mxu0 %v1248
        %v1493 = vpop.f32.mrf.mxu0
        %v1494 = vadd.f32 0.0, %v1493
        %v1495 = vpop.f32.mrf.mxu0
        %v1496 = vadd.f32 0.0, %v1495
        %1497 = vmatmul.bf16.gmra.mxu0 %v1251
        %v1498 = vpop.f32.mrf.mxu0
        %v1499 = vadd.f32 0.0, %v1498
        %v1500 = vpop.f32.mrf.mxu0
        %v1501 = vadd.f32 0.0, %v1500
        %1502 = vmatmul.bf16.gmra.mxu0 %v1254
        %v1503 = vpop.f32.mrf.mxu0
        %v1504 = vadd.f32 0.0, %v1503
        %v1505 = vpop.f32.mrf.mxu0
        %v1506 = vadd.f32 0.0, %v1505
        %1507 = vmatmul.bf16.gmra.mxu0 %v1257
        %v1508 = vpop.f32.mrf.mxu0
        %v1509 = vadd.f32 0.0, %v1508
        %v1510 = vpop.f32.mrf.mxu0
        %v1511 = vadd.f32 0.0, %v1510
        %1512 = vmatmul.bf16.gmra.mxu0 %v1260
        %v1513 = vpop.f32.mrf.mxu0
        %v1514 = vadd.f32 0.0, %v1513
        %v1515 = vpop.f32.mrf.mxu0
        %v1516 = vadd.f32 0.0, %v1515
        %1517 = vmatmul.bf16.gmra.mxu0 %v1263
        %v1518 = vpop.f32.mrf.mxu0
        %v1519 = vadd.f32 0.0, %v1518
        %v1520 = vpop.f32.mrf.mxu0
        %v1521 = vadd.f32 0.0, %v1520
        %1522 = vmatmul.bf16.gmra.mxu0 %v1266
        %v1523 = vpop.f32.mrf.mxu0
        %v1524 = vadd.f32 0.0, %v1523
        %v1525 = vpop.f32.mrf.mxu0
        %v1526 = vadd.f32 0.0, %v1525
        %1527 = vmatmul.bf16.gmra.mxu0 %v1269
        %v1528 = vpop.f32.mrf.mxu0
        %v1529 = vadd.f32 0.0, %v1528
        %v1530 = vpop.f32.mrf.mxu0
        %v1531 = vadd.f32 0.0, %v1530
        %1532 = vmatmul.bf16.gmra.mxu0 %v1272
        %v1533 = vpop.f32.mrf.mxu0
        %v1534 = vadd.f32 0.0, %v1533
        %v1535 = vpop.f32.mrf.mxu0
        %v1536 = vadd.f32 0.0, %v1535
        %1537 = vmatmul.bf16.gmra.mxu0 %v1275
        %v1538 = vpop.f32.mrf.mxu0
        %v1539 = vadd.f32 0.0, %v1538
        %v1540 = vpop.f32.mrf.mxu0
        %v1541 = vadd.f32 0.0, %v1540
        %1542 = vmatmul.bf16.gmra.mxu0 %v1278
        %v1543 = vpop.f32.mrf.mxu0
        %v1544 = vadd.f32 0.0, %v1543
        %v1545 = vpop.f32.mrf.mxu0
        %v1546 = vadd.f32 0.0, %v1545
        %1547 = vmatmul.bf16.gmra.mxu0 %v1281
        %v1548 = vpop.f32.mrf.mxu0
        %v1549 = vadd.f32 0.0, %v1548
        %v1550 = vpop.f32.mrf.mxu0
        %v1551 = vadd.f32 0.0, %v1550
        %1552 = vmatmul.bf16.gmra.mxu0 %v1284
        %v1553 = vpop.f32.mrf.mxu0
        %v1554 = vadd.f32 0.0, %v1553
        %v1555 = vpop.f32.mrf.mxu0
        %v1556 = vadd.f32 0.0, %v1555
        %1557 = vmatmul.bf16.gmra.mxu0 %v1287
        %v1558 = vpop.f32.mrf.mxu0
        %v1559 = vadd.f32 0.0, %v1558
        %v1560 = vpop.f32.mrf.mxu0
        %v1561 = vadd.f32 0.0, %v1560
        %1562 = vmatmul.bf16.gmra.mxu0 %v1290
        %v1563 = vpop.f32.mrf.mxu0
        %v1564 = vadd.f32 0.0, %v1563
        %v1565 = vpop.f32.mrf.mxu0
        %v1566 = vadd.f32 0.0, %v1565
        %1567 = vmatmul.bf16.gmra.mxu0 %v1293
        %v1568 = vpop.f32.mrf.mxu0
        %v1569 = vadd.f32 0.0, %v1568
        %v1570 = vpop.f32.mrf.mxu0
        %v1571 = vadd.f32 0.0, %v1570
        %1572 = vmatmul.bf16.gmra.mxu0 %v1296
        %v1573 = vpop.f32.mrf.mxu0
        %v1574 = vadd.f32 0.0, %v1573
        %v1575 = vpop.f32.mrf.mxu0
        %v1576 = vadd.f32 0.0, %v1575
        %1577 = vmatmul.bf16.gmra.mxu0 %v1299
        %v1578 = vpop.f32.mrf.mxu0
        %v1579 = vadd.f32 0.0, %v1578
        %v1580 = vpop.f32.mrf.mxu0
        %v1581 = vadd.f32 0.0, %v1580
        %1582 = vmatmul.bf16.gmra.mxu0 %v1302
        %v1583 = vpop.f32.mrf.mxu0
        %v1584 = vadd.f32 0.0, %v1583
        %v1585 = vpop.f32.mrf.mxu0
        %v1586 = vadd.f32 0.0, %v1585
        %1587 = vmatmul.bf16.gmra.mxu0 %v1305
        %v1588 = vpop.f32.mrf.mxu0
        %v1589 = vadd.f32 0.0, %v1588
        %v1590 = vpop.f32.mrf.mxu0
        %v1591 = vadd.f32 0.0, %v1590
        %1592 = vmatmul.bf16.gmra.mxu0 %v1308
        %v1593 = vpop.f32.mrf.mxu0
        %v1594 = vadd.f32 0.0, %v1593
        %v1595 = vpop.f32.mrf.mxu0
        %v1596 = vadd.f32 0.0, %v1595
        %1597 = vmatmul.bf16.gmra.mxu0 %v1311
        %v1598 = vpop.f32.mrf.mxu0
        %v1599 = vadd.f32 0.0, %v1598
        %v1600 = vpop.f32.mrf.mxu0
        %v1601 = vadd.f32 0.0, %v1600
        %1602 = vmatmul.bf16.gmra.mxu0 %v1314
        %v1603 = vpop.f32.mrf.mxu0
        %v1604 = vadd.f32 0.0, %v1603
        %v1605 = vpop.f32.mrf.mxu0
        %v1606 = vadd.f32 0.0, %v1605
        %1607 = vmatmul.bf16.gmra.mxu0 %v1317
        %v1608 = vpop.f32.mrf.mxu0
        %v1609 = vadd.f32 0.0, %v1608
        %v1610 = vpop.f32.mrf.mxu0
        %v1611 = vadd.f32 0.0, %v1610
        %1612 = vmatmul.bf16.gmra.mxu0 %v1320
        %v1613 = vpop.f32.mrf.mxu0
        %v1614 = vadd.f32 0.0, %v1613
        %v1615 = vpop.f32.mrf.mxu0
        %v1616 = vadd.f32 0.0, %v1615
        %1617 = vmatmul.bf16.gmra.mxu0 %v1323
        %v1618 = vpop.f32.mrf.mxu0
        %v1619 = vadd.f32 0.0, %v1618
        %v1620 = vpop.f32.mrf.mxu0
        %v1621 = vadd.f32 0.0, %v1620
        %1622 = vmatmul.bf16.gmra.mxu0 %v1326
        %v1623 = vpop.f32.mrf.mxu0
        %v1624 = vadd.f32 0.0, %v1623
        %v1625 = vpop.f32.mrf.mxu0
        %v1626 = vadd.f32 0.0, %v1625
        %1627 = vmatmul.bf16.gmra.mxu0 %v1329
        %v1628 = vpop.f32.mrf.mxu0
        %v1629 = vadd.f32 0.0, %v1628
        %v1630 = vpop.f32.mrf.mxu0
        %v1631 = vadd.f32 0.0, %v1630
        %1632 = vmatmul.bf16.gmra.mxu0 %v1332
        %v1633 = vpop.f32.mrf.mxu0
        %v1634 = vadd.f32 0.0, %v1633
        %v1635 = vpop.f32.mrf.mxu0
        %v1636 = vadd.f32 0.0, %v1635
        %1637 = vmatmul.bf16.gmra.mxu0 %v1335
        %v1638 = vpop.f32.mrf.mxu0
        %v1639 = vadd.f32 0.0, %v1638
        %v1640 = vpop.f32.mrf.mxu0
        %v1641 = vadd.f32 0.0, %v1640
        %1642 = vmatmul.bf16.gmra.mxu0 %v1338
        %v1643 = vpop.f32.mrf.mxu0
        %v1644 = vadd.f32 0.0, %v1643
        %v1645 = vpop.f32.mrf.mxu0
        %v1646 = vadd.f32 0.0, %v1645
        %1647 = vmatmul.bf16.gmra.mxu0 %v1341
        %v1648 = vpop.f32.mrf.mxu0
        %v1649 = vadd.f32 0.0, %v1648
        %v1650 = vpop.f32.mrf.mxu0
        %v1651 = vadd.f32 0.0, %v1650
        %1652 = vmatmul.bf16.gmra.mxu0 %v1344
        %v1653 = vpop.f32.mrf.mxu0
        %v1654 = vadd.f32 0.0, %v1653
        %v1655 = vpop.f32.mrf.mxu0
        %v1656 = vadd.f32 0.0, %v1655
        %1657 = vmatmul.bf16.gmra.mxu0 %v1347
        %v1658 = vpop.f32.mrf.mxu0
        %v1659 = vadd.f32 0.0, %v1658
        %v1660 = vpop.f32.mrf.mxu0
        %v1661 = vadd.f32 0.0, %v1660
        %1662 = vmatmul.bf16.gmra.mxu0 %v1350
        %v1663 = vpop.f32.mrf.mxu0
        %v1664 = vadd.f32 0.0, %v1663
        %v1665 = vpop.f32.mrf.mxu0
        %v1666 = vadd.f32 0.0, %v1665
        %1667 = vmatmul.bf16.gmra.mxu0 %v1353
        %v1668 = vpop.f32.mrf.mxu0
        %v1669 = vadd.f32 0.0, %v1668
        %v1670 = vpop.f32.mrf.mxu0
        %v1671 = vadd.f32 0.0, %v1670
        %1672 = vmatmul.bf16.gmra.mxu0 %v1356
        %v1673 = vpop.f32.mrf.mxu0
        %v1674 = vadd.f32 0.0, %v1673
        %v1675 = vpop.f32.mrf.mxu0
        %v1676 = vadd.f32 0.0, %v1675
        %1677 = vmatmul.bf16.gmra.mxu0 %v1359
        %v1678 = vpop.f32.mrf.mxu0
        %v1679 = vadd.f32 0.0, %v1678
        %v1680 = vpop.f32.mrf.mxu0
        %v1681 = vadd.f32 0.0, %v1680
        %1682 = vmatmul.bf16.gmra.mxu0 %v1362
        %v1683 = vpop.f32.mrf.mxu0
        %v1684 = vadd.f32 0.0, %v1683
        %v1685 = vpop.f32.mrf.mxu0
        %v1686 = vadd.f32 0.0, %v1685
        %1687 = vmatmul.bf16.gmra.mxu0 %v1365
        %v1688 = vpop.f32.mrf.mxu0
        %v1689 = vadd.f32 0.0, %v1688
        %v1690 = vpop.f32.mrf.mxu0
        %v1691 = vadd.f32 0.0, %v1690
        %1692 = vmatmul.bf16.gmra.mxu0 %v1368
        %v1693 = vpop.f32.mrf.mxu0
        %v1694 = vadd.f32 0.0, %v1693
        %v1695 = vpop.f32.mrf.mxu0
        %v1696 = vadd.f32 0.0, %v1695
        %1697 = vmatmul.bf16.gmra.mxu0 %v1371
        %v1698 = vpop.f32.mrf.mxu0
        %v1699 = vadd.f32 0.0, %v1698
        %v1700 = vpop.f32.mrf.mxu0
        %v1701 = vadd.f32 0.0, %v1700
        %1702 = vmatmul.bf16.gmra.mxu0 %v1374
        %v1703 = vpop.f32.mrf.mxu0
        %v1704 = vadd.f32 0.0, %v1703
        %v1705 = vpop.f32.mrf.mxu0
        %v1706 = vadd.f32 0.0, %v1705
        %1707 = vmatmul.bf16.gmra.mxu0 %v1377
        %v1708 = vpop.f32.mrf.mxu0
        %v1709 = vadd.f32 0.0, %v1708
        %v1710 = vpop.f32.mrf.mxu0
        %v1711 = vadd.f32 0.0, %v1710
        %1712 = vmatmul.bf16.gmra.mxu0 %v1380
        %v1713 = vpop.f32.mrf.mxu0
        %v1714 = vadd.f32 0.0, %v1713
        %v1715 = vpop.f32.mrf.mxu0
        %v1716 = vadd.f32 0.0, %v1715
        %1717 = vdwg.mxu0
        %v1718 = vmax.f32 %v1399, %v1479
        %v1719 = vmax.f32 %v1401, %v1481
        %v1720 = vmax.f32 %v1404, %v1484
        %v1721 = vmax.f32 %v1406, %v1486
        %v1722 = vmax.f32 %v1409, %v1489
        %v1723 = vmax.f32 %v1411, %v1491
        %v1724 = vmax.f32 %v1414, %v1494
        %v1725 = vmax.f32 %v1416, %v1496
        %v1726 = vmax.f32 %v1419, %v1499
        %v1727 = vmax.f32 %v1421, %v1501
        %v1728 = vmax.f32 %v1424, %v1504
        %v1729 = vmax.f32 %v1426, %v1506
        %v1730 = vmax.f32 %v1429, %v1509
        %v1731 = vmax.f32 %v1431, %v1511
        %v1732 = vmax.f32 %v1434, %v1514
        %v1733 = vmax.f32 %v1436, %v1516
        %v1734 = vmax.f32 %v1439, %v1519
        %v1735 = vmax.f32 %v1441, %v1521
        %v1736 = vmax.f32 %v1444, %v1524
        %v1737 = vmax.f32 %v1446, %v1526
        %v1738 = vmax.f32 %v1449, %v1529
        %v1739 = vmax.f32 %v1451, %v1531
        %v1740 = vmax.f32 %v1454, %v1534
        %v1741 = vmax.f32 %v1456, %v1536
        %v1742 = vmax.f32 %v1459, %v1539
        %v1743 = vmax.f32 %v1461, %v1541
        %v1744 = vmax.f32 %v1464, %v1544
        %v1745 = vmax.f32 %v1466, %v1546
        %v1746 = vmax.f32 %v1469, %v1549
        %v1747 = vmax.f32 %v1471, %v1551
        %v1748 = vmax.f32 %v1474, %v1554
        %v1749 = vmax.f32 %v1476, %v1556
        %v1750 = vmax.f32 %v1559, %v1639
        %v1751 = vmax.f32 %v1561, %v1641
        %v1752 = vmax.f32 %v1564, %v1644
        %v1753 = vmax.f32 %v1566, %v1646
        %v1754 = vmax.f32 %v1569, %v1649
        %v1755 = vmax.f32 %v1571, %v1651
        %v1756 = vmax.f32 %v1574, %v1654
        %v1757 = vmax.f32 %v1576, %v1656
        %v1758 = vmax.f32 %v1579, %v1659
        %v1759 = vmax.f32 %v1581, %v1661
        %v1760 = vmax.f32 %v1584, %v1664
        %v1761 = vmax.f32 %v1586, %v1666
        %v1762 = vmax.f32 %v1589, %v1669
        %v1763 = vmax.f32 %v1591, %v1671
        %v1764 = vmax.f32 %v1594, %v1674
        %v1765 = vmax.f32 %v1596, %v1676
        %v1766 = vmax.f32 %v1599, %v1679
        %v1767 = vmax.f32 %v1601, %v1681
        %v1768 = vmax.f32 %v1604, %v1684
        %v1769 = vmax.f32 %v1606, %v1686
        %v1770 = vmax.f32 %v1609, %v1689
        %v1771 = vmax.f32 %v1611, %v1691
        %v1772 = vmax.f32 %v1614, %v1694
        %v1773 = vmax.f32 %v1616, %v1696
        %v1774 = vmax.f32 %v1619, %v1699
        %v1775 = vmax.f32 %v1621, %v1701
        %v1776 = vmax.f32 %v1624, %v1704
        %v1777 = vmax.f32 %v1626, %v1706
        %v1778 = vmax.f32 %v1629, %v1709
        %v1779 = vmax.f32 %v1631, %v1711
        %v1780 = vmax.f32 %v1634, %v1714
        %v1781 = vmax.f32 %v1636, %v1716
        %v1782 = vmax.f32 %v1718, %v1750
        %v1783 = vmax.f32 %v1719, %v1751
        %v1784 = vmax.f32 %v1720, %v1752
        %v1785 = vmax.f32 %v1721, %v1753
        %v1786 = vmax.f32 %v1722, %v1754
        %v1787 = vmax.f32 %v1723, %v1755
        %v1788 = vmax.f32 %v1724, %v1756
        %v1789 = vmax.f32 %v1725, %v1757
        %v1790 = vmax.f32 %v1726, %v1758
        %v1791 = vmax.f32 %v1727, %v1759
        %v1792 = vmax.f32 %v1728, %v1760
        %v1793 = vmax.f32 %v1729, %v1761
        %v1794 = vmax.f32 %v1730, %v1762
        %v1795 = vmax.f32 %v1731, %v1763
        %v1796 = vmax.f32 %v1732, %v1764
        %v1797 = vmax.f32 %v1733, %v1765
        %v1798 = vmax.f32 %v1734, %v1766
        %v1799 = vmax.f32 %v1735, %v1767
        %v1800 = vmax.f32 %v1736, %v1768
        %v1801 = vmax.f32 %v1737, %v1769
        %v1802 = vmax.f32 %v1738, %v1770
        %v1803 = vmax.f32 %v1739, %v1771
        %v1804 = vmax.f32 %v1740, %v1772
        %v1805 = vmax.f32 %v1741, %v1773
        %v1806 = vmax.f32 %v1742, %v1774
        %v1807 = vmax.f32 %v1743, %v1775
        %v1808 = vmax.f32 %v1744, %v1776
        %v1809 = vmax.f32 %v1745, %v1777
        %v1810 = vmax.f32 %v1746, %v1778
        %v1811 = vmax.f32 %v1747, %v1779
        %v1812 = vmax.f32 %v1748, %v1780
        %v1813 = vmax.f32 %v1749, %v1781
        %v1814 = vld [vmem:[%s2] sm:$0x1]
        %v1816 = vperm.slane %v1814, 0
        %v1818 = vadd.f32 %v1782, %v1816
        %v1819 = vadd.f32 %v1783, %v1816
        %v1820 = vadd.f32 %v1784, %v1816
        %v1821 = vadd.f32 %v1785, %v1816
        %v1822 = vadd.f32 %v1786, %v1816
        %v1823 = vadd.f32 %v1787, %v1816
        %v1824 = vadd.f32 %v1788, %v1816
        %v1825 = vadd.f32 %v1789, %v1816
        %v1826 = vadd.f32 %v1790, %v1816
        %v1827 = vadd.f32 %v1791, %v1816
        %v1828 = vadd.f32 %v1792, %v1816
        %v1829 = vadd.f32 %v1793, %v1816
        %v1830 = vadd.f32 %v1794, %v1816
        %v1831 = vadd.f32 %v1795, %v1816
        %v1832 = vadd.f32 %v1796, %v1816
        %v1833 = vadd.f32 %v1797, %v1816
        %v1834 = vadd.f32 %v1798, %v1816
        %v1835 = vadd.f32 %v1799, %v1816
        %v1836 = vadd.f32 %v1800, %v1816
        %v1837 = vadd.f32 %v1801, %v1816
        %v1838 = vadd.f32 %v1802, %v1816
        %v1839 = vadd.f32 %v1803, %v1816
        %v1840 = vadd.f32 %v1804, %v1816
        %v1841 = vadd.f32 %v1805, %v1816
        %v1842 = vadd.f32 %v1806, %v1816
        %v1843 = vadd.f32 %v1807, %v1816
        %v1844 = vadd.f32 %v1808, %v1816
        %v1845 = vadd.f32 %v1809, %v1816
        %v1846 = vadd.f32 %v1810, %v1816
        %v1847 = vadd.f32 %v1811, %v1816
        %v1848 = vadd.f32 %v1812, %v1816
        %v1849 = vadd.f32 %v1813, %v1816
        %v1850 = vmax.f32 %v1818, 0.0
        %v1851 = vmax.f32 %v1819, 0.0
        %v1852 = vmax.f32 %v1820, 0.0
        %v1853 = vmax.f32 %v1821, 0.0
        %v1854 = vmax.f32 %v1822, 0.0
        %v1855 = vmax.f32 %v1823, 0.0
        %v1856 = vmax.f32 %v1824, 0.0
        %v1857 = vmax.f32 %v1825, 0.0
        %v1858 = vmax.f32 %v1826, 0.0
        %v1859 = vmax.f32 %v1827, 0.0
        %v1860 = vmax.f32 %v1828, 0.0
        %v1861 = vmax.f32 %v1829, 0.0
        %v1862 = vmax.f32 %v1830, 0.0
        %v1863 = vmax.f32 %v1831, 0.0
        %v1864 = vmax.f32 %v1832, 0.0
        %v1865 = vmax.f32 %v1833, 0.0
        %v1866 = vmax.f32 %v1834, 0.0
        %v1867 = vmax.f32 %v1835, 0.0
        %v1868 = vmax.f32 %v1836, 0.0
        %v1869 = vmax.f32 %v1837, 0.0
        %v1870 = vmax.f32 %v1838, 0.0
        %v1871 = vmax.f32 %v1839, 0.0
        %v1872 = vmax.f32 %v1840, 0.0
        %v1873 = vmax.f32 %v1841, 0.0
        %v1874 = vmax.f32 %v1842, 0.0
        %v1875 = vmax.f32 %v1843, 0.0
        %v1876 = vmax.f32 %v1844, 0.0
        %v1877 = vmax.f32 %v1845, 0.0
        %v1878 = vmax.f32 %v1846, 0.0
        %v1879 = vmax.f32 %v1847, 0.0
        %v1880 = vmax.f32 %v1848, 0.0
        %v1881 = vmax.f32 %v1849, 0.0
        %v1882 = vpack.c.bf16 %v1850, %v1850
        %v1883 = vpack.c.bf16 %v1851, %v1851
        %v1884 = vpack.c.bf16 %v1852, %v1852
        %v1885 = vpack.c.bf16 %v1853, %v1853
        %v1886 = vpack.c.bf16 %v1854, %v1854
        %v1887 = vpack.c.bf16 %v1855, %v1855
        %v1888 = vpack.c.bf16 %v1856, %v1856
        %v1889 = vpack.c.bf16 %v1857, %v1857
        %v1890 = vpack.c.bf16 %v1858, %v1858
        %v1891 = vpack.c.bf16 %v1859, %v1859
        %v1892 = vpack.c.bf16 %v1860, %v1860
        %v1893 = vpack.c.bf16 %v1861, %v1861
        %v1894 = vpack.c.bf16 %v1862, %v1862
        %v1895 = vpack.c.bf16 %v1863, %v1863
        %v1896 = vpack.c.bf16 %v1864, %v1864
        %v1897 = vpack.c.bf16 %v1865, %v1865
        %v1898 = vpack.c.bf16 %v1866, %v1866
        %v1899 = vpack.c.bf16 %v1867, %v1867
        %v1900 = vpack.c.bf16 %v1868, %v1868
        %v1901 = vpack.c.bf16 %v1869, %v1869
        %v1902 = vpack.c.bf16 %v1870, %v1870
        %v1903 = vpack.c.bf16 %v1871, %v1871
        %v1904 = vpack.c.bf16 %v1872, %v1872
        %v1905 = vpack.c.bf16 %v1873, %v1873
        %v1906 = vpack.c.bf16 %v1874, %v1874
        %v1907 = vpack.c.bf16 %v1875, %v1875
        %v1908 = vpack.c.bf16 %v1876, %v1876
        %v1909 = vpack.c.bf16 %v1877, %v1877
        %v1910 = vpack.c.bf16 %v1878, %v1878
        %v1911 = vpack.c.bf16 %v1879, %v1879
        %v1912 = vpack.c.bf16 %v1880, %v1880
        %v1913 = vpack.c.bf16 %v1881, %v1881
        %1914 = vst [vmem:[%s723] sm:$0xf] %v1882
        %1915 = vst [vmem:[%s723 + $0x4] sm:$0xf] %v1883
        %1916 = vst [vmem:[%s723 + $0x8] sm:$0xf] %v1884
        %1917 = vst [vmem:[%s723 + $0xc] sm:$0xf] %v1885
        %1918 = vst [vmem:[%s723 + $0x10] sm:$0xf] %v1886
        %1919 = vst [vmem:[%s723 + $0x14] sm:$0xf] %v1887
        %1920 = vst [vmem:[%s723 + $0x18] sm:$0xf] %v1888
        %1921 = vst [vmem:[%s723 + $0x1c] sm:$0xf] %v1889
        %1922 = vst [vmem:[%s723 + $0x20] sm:$0xf] %v1890
        %1923 = vst [vmem:[%s723 + $0x24] sm:$0xf] %v1891
        %1924 = vst [vmem:[%s723 + $0x28] sm:$0xf] %v1892
        %1925 = vst [vmem:[%s723 + $0x2c] sm:$0xf] %v1893
        %1926 = vst [vmem:[%s723 + $0x30] sm:$0xf] %v1894
        %1927 = vst [vmem:[%s723 + $0x34] sm:$0xf] %v1895
        %1928 = vst [vmem:[%s723 + $0x38] sm:$0xf] %v1896
        %1929 = vst [vmem:[%s723 + $0x3c] sm:$0xf] %v1897
        %1930 = vst [vmem:[%s723 + $0x40] sm:$0xf] %v1898
        %1931 = vst [vmem:[%s723 + $0x44] sm:$0xf] %v1899
        %1932 = vst [vmem:[%s723 + $0x48] sm:$0xf] %v1900
        %1933 = vst [vmem:[%s723 + $0x4c] sm:$0xf] %v1901
        %1934 = vst [vmem:[%s723 + $0x50] sm:$0xf] %v1902
        %1935 = vst [vmem:[%s723 + $0x54] sm:$0xf] %v1903
        %1936 = vst [vmem:[%s723 + $0x58] sm:$0xf] %v1904
        %1937 = vst [vmem:[%s723 + $0x5c] sm:$0xf] %v1905
        %1938 = vst [vmem:[%s723 + $0x60] sm:$0xf] %v1906
        %1939 = vst [vmem:[%s723 + $0x64] sm:$0xf] %v1907
        %1940 = vst [vmem:[%s723 + $0x68] sm:$0xf] %v1908
        %1941 = vst [vmem:[%s723 + $0x6c] sm:$0xf] %v1909
        %1942 = vst [vmem:[%s723 + $0x70] sm:$0xf] %v1910
        %1943 = vst [vmem:[%s723 + $0x74] sm:$0xf] %v1911
        %1944 = vst [vmem:[%s723 + $0x78] sm:$0xf] %v1912
        %1945 = vst [vmem:[%s723 + $0x7c] sm:$0xf] %v1913
        %s1946 = smul.u32 32, %s14
        %p1947 = scmp.lt.s32.totalorder %s1946, 63
        %s1948 = scalar_select %p1947, %s1946, 63
        %s1949 = smul.addr %s1948, 4
        %s1950 = scalar_lea.vmem %s3, %s1949
        // Predicated region
        $region74: #{net1_forward.3} parent=68 // pred_check
          %p1951 = pneg %p100
        $region75: #{net1_forward.3} parent=68 // pred_check_branch
          %1953 = sbr.rel (%p1951) target = $region77
        $region76: #{net1_forward.3} parent=68 // pred_region
          %s1954 = smul.u32 32, %s14
        $region77: #{net1_forward.3} parent=68 // pred_fallthru
          _
      $region69: #{net1_forward.3} parent=5 // pred_fallthru
        _
      %p1955 = scmp.le.s32.totalorder 2, %s9
      // Predicated region
      $region78: #{net1_forward.3} parent=5 // pred_check
        %p1956 = pneg %p1955
      $region79: #{net1_forward.3} parent=5 // pred_check_branch
        %1958 = sbr.rel (%p1956) target = $region81
      $region80: #{net1_forward.3} parent=5 // pred_region
        %s1959 = ssub.s32 %s9, 2
        // Predicated region
        $region82: #{net1_forward.3} parent=80 // pred_check
          %p1960 = pneg %p106
        $region83: #{net1_forward.3} parent=80 // pred_check_branch
          %1962 = sbr.rel (%p1960) target = $region85
        $region84: #{net1_forward.3} parent=80 // pred_region
          %s1963 = smul.u32 32, %s15
          %p1964 = scmp.lt.s32.totalorder %s1963, 63
          %s1965 = scalar_select %p1964, %s1963, 63
          %s1966 = smul.addr %s1965, 4
          %s1967 = scalar_lea.vmem %s3, %s1966
        $region85: #{net1_forward.3} parent=80 // pred_fallthru
          _
      $region81: #{net1_forward.3} parent=5 // pred_fallthru
        _
    $region6: #{net1_forward.3} parent=1 // loop_footer
      %s13 = sadd.s32 1, %s9
    $region7: #{net1_forward.3} parent=1 // loop_footer_branch
      %8 = sbr.rel target = $region3
    $region8: #{net1_forward.3} parent=1 // loop_exit
      _

// kernel: net1_forward.4
$region0: #{net1_forward.4}
  #allocation0 [shape = 'u32[]', space=smem, size = 0x4, offset = 0x4, fixed_abs, tag = 'smem constant byte address 0x4 - core index']
  #allocation1 [shape = 'u32[72,128]{1,0:T(1,128)}', space=vmem, size = 0x9000, scoped, tag = 'internal scratch']
  %s0 = inlined_call_operand.vmem [shape: bf16[4,32,250], index: 0, kind: input, shape index: {}]
  %s1 = inlined_call_operand.vmem [shape: bf16[250,128], index: 1, kind: input, shape index: {}]
  %s2 = inlined_call_operand.vmem [shape: f32[1,128], index: 2, kind: input, shape index: {}]
  %s3 = inlined_call_operand.vmem [shape: bf16[32,128], index: 3, kind: output, shape index: {}]
  %s4 = sld [smem:[#allocation0]]
  $region22: #{net1_forward.4} parent=0
    _
  %s6 = ssub.s32 1, %s4
  %s7 = scalar_select 0, %s6, %s4
  // Predicated region
  $region2: #{net1_forward.4} parent=0 // pred_check
    _
  $region3: #{net1_forward.4} parent=0 // pred_check_branch
    %9 = sbr.rel (0) target = $region5
  $region4: #{net1_forward.4} parent=0 // pred_region
    _
  $region5: #{net1_forward.4} parent=0 // pred_fallthru
    _
  // Predicated region
  $region6: #{net1_forward.4} parent=0 // pred_check
    _
  $region7: #{net1_forward.4} parent=0 // pred_check_branch
    %11 = sbr.rel (0) target = $region9
  $region8: #{net1_forward.4} parent=0 // pred_region
    _
  $region9: #{net1_forward.4} parent=0 // pred_fallthru
    _
  // Predicated region
  $region10: #{net1_forward.4} parent=0 // pred_check
    _
  $region11: #{net1_forward.4} parent=0 // pred_check_branch
    %13 = sbr.rel (0) target = $region13
  $region12: #{net1_forward.4} parent=0 // pred_region
    _
  $region13: #{net1_forward.4} parent=0 // pred_fallthru
    _
  %v14 = vld [vmem:[%s0] sm:$0xff]
  %v15 = vld [vmem:[%s0 + $0x8] sm:$0xff]
  %v16 = vld [vmem:[%s0 + $0x10] sm:$0xff]
  %v17 = vld [vmem:[%s0 + $0x18] sm:$0xff]
  %v18 = vld [vmem:[%s0 + $0x20] sm:$0xff]
  %v19 = vld [vmem:[%s0 + $0x28] sm:$0xff]
  %v20 = vld [vmem:[%s0 + $0x30] sm:$0xff]
  %v21 = vld [vmem:[%s0 + $0x38] sm:$0xff]
  %v22 = vld [vmem:[%s0 + $0x40] sm:$0xff]
  %v23 = vld [vmem:[%s0 + $0x48] sm:$0xff]
  %v24 = vld [vmem:[%s0 + $0x50] sm:$0xff]
  %v25 = vld [vmem:[%s0 + $0x58] sm:$0xff]
  %v26 = vld [vmem:[%s0 + $0x60] sm:$0xff]
  %v27 = vld [vmem:[%s0 + $0x68] sm:$0xff]
  %v28 = vld [vmem:[%s0 + $0x70] sm:$0xff]
  %v29 = vld [vmem:[%s0 + $0x78] sm:$0xff]
  %v30 = vld [vmem:[%s1] sm:$0xf]
  %v31 = vld [vmem:[%s1 + $0x4] sm:$0xf]
  %v32 = vld [vmem:[%s1 + $0x8] sm:$0xf]
  %v33 = vld [vmem:[%s1 + $0xc] sm:$0xf]
  %v34 = vld [vmem:[%s1 + $0x10] sm:$0xf]
  %v35 = vld [vmem:[%s1 + $0x14] sm:$0xf]
  %v36 = vld [vmem:[%s1 + $0x18] sm:$0xf]
  %v37 = vld [vmem:[%s1 + $0x1c] sm:$0xf]
  %v38 = vld [vmem:[%s1 + $0x20] sm:$0xf]
  %v39 = vld [vmem:[%s1 + $0x24] sm:$0xf]
  %v40 = vld [vmem:[%s1 + $0x28] sm:$0xf]
  %v41 = vld [vmem:[%s1 + $0x2c] sm:$0xf]
  %v42 = vld [vmem:[%s1 + $0x30] sm:$0xf]
  %v43 = vld [vmem:[%s1 + $0x34] sm:$0xf]
  %v44 = vld [vmem:[%s1 + $0x38] sm:$0xf]
  %v45 = vld [vmem:[%s1 + $0x3c] sm:$0xf]
  %v46 = vld [vmem:[%s1 + $0x40] sm:$0xf]
  %v47 = vld [vmem:[%s1 + $0x44] sm:$0xf]
  %v48 = vld [vmem:[%s1 + $0x48] sm:$0xf]
  %v49 = vld [vmem:[%s1 + $0x4c] sm:$0xf]
  %v50 = vld [vmem:[%s1 + $0x50] sm:$0xf]
  %v51 = vld [vmem:[%s1 + $0x54] sm:$0xf]
  %v52 = vld [vmem:[%s1 + $0x58] sm:$0xf]
  %v53 = vld [vmem:[%s1 + $0x5c] sm:$0xf]
  %v54 = vld [vmem:[%s1 + $0x60] sm:$0xf]
  %v55 = vld [vmem:[%s1 + $0x64] sm:$0xf]
  %v56 = vld [vmem:[%s1 + $0x68] sm:$0xf]
  %v57 = vld [vmem:[%s1 + $0x6c] sm:$0xf]
  %v58 = vld [vmem:[%s1 + $0x70] sm:$0xf]
  %v59 = vld [vmem:[%s1 + $0x74] sm:$0xf]
  %v60 = vld [vmem:[%s1 + $0x78] sm:$0xf]
  %v61 = vld [vmem:[%s1 + $0x7c] sm:$0x1]
  %v78 = vunpack.c.l.b16 %v14
  %v79 = vunpack.c.h.b16 %v14
  %v80 = vunpack.c.l.b16 %v15
  %v81 = vunpack.c.h.b16 %v15
  %v82 = vunpack.c.l.b16 %v16
  %v83 = vunpack.c.h.b16 %v16
  %v84 = vunpack.c.l.b16 %v17
  %v85 = vunpack.c.h.b16 %v17
  %v86 = vunpack.c.l.b16 %v18
  %v87 = vunpack.c.h.b16 %v18
  %v88 = vunpack.c.l.b16 %v19
  %v89 = vunpack.c.h.b16 %v19
  %v90 = vunpack.c.l.b16 %v20
  %v91 = vunpack.c.h.b16 %v20
  %v92 = vunpack.c.l.b16 %v21
  %v93 = vunpack.c.h.b16 %v21
  %v94 = vunpack.c.l.b16 %v22
  %v95 = vunpack.c.h.b16 %v22
  %v96 = vunpack.c.l.b16 %v23
  %v97 = vunpack.c.h.b16 %v23
  %v98 = vunpack.c.l.b16 %v24
  %v99 = vunpack.c.h.b16 %v24
  %v100 = vunpack.c.l.b16 %v25
  %v101 = vunpack.c.h.b16 %v25
  %v102 = vunpack.c.l.b16 %v26
  %v103 = vunpack.c.h.b16 %v26
  %v104 = vunpack.c.l.b16 %v27
  %v105 = vunpack.c.h.b16 %v27
  %v106 = vunpack.c.l.b16 %v28
  %v107 = vunpack.c.h.b16 %v28
  %v108 = vunpack.c.l.b16 %v29
  %v109 = vunpack.c.h.b16 %v29
  %v110 = vpack.c.b16 %v80, %v78
  %v111 = vpack.c.b16 %v81, %v79
  %v112 = vpack.c.b16 %v84, %v82
  %v113 = vpack.c.b16 %v85, %v83
  %v114 = vpack.c.b16 %v88, %v86
  %v115 = vpack.c.b16 %v89, %v87
  %v116 = vpack.c.b16 %v92, %v90
  %v117 = vpack.c.b16 %v93, %v91
  %v118 = vpack.c.b16 %v96, %v94
  %v119 = vpack.c.b16 %v97, %v95
  %v120 = vpack.c.b16 %v100, %v98
  %v121 = vpack.c.b16 %v101, %v99
  %v122 = vpack.c.b16 %v104, %v102
  %v123 = vpack.c.b16 %v105, %v103
  %v124 = vpack.c.b16 %v108, %v106
  %v125 = vpack.c.b16 %v109, %v107
  %v166 = vunpack.c.l.b16 %v30
  %v167 = vunpack.c.l.b16 %v31
  %v168 = vunpack.c.l.b16 %v32
  %v169 = vunpack.c.l.b16 %v33
  %v170 = vunpack.c.l.b16 %v34
  %v171 = vunpack.c.l.b16 %v35
  %v172 = vunpack.c.l.b16 %v36
  %v173 = vunpack.c.l.b16 %v37
  %v174 = vunpack.c.l.b16 %v38
  %v175 = vunpack.c.l.b16 %v39
  %v176 = vunpack.c.l.b16 %v40
  %v177 = vunpack.c.l.b16 %v41
  %v178 = vunpack.c.l.b16 %v42
  %v179 = vunpack.c.l.b16 %v43
  %v180 = vunpack.c.l.b16 %v44
  %v181 = vunpack.c.l.b16 %v45
  %v182 = vunpack.c.l.b16 %v46
  %v183 = vunpack.c.l.b16 %v47
  %v184 = vunpack.c.l.b16 %v48
  %v185 = vunpack.c.l.b16 %v49
  %v186 = vunpack.c.l.b16 %v50
  %v187 = vunpack.c.l.b16 %v51
  %v188 = vunpack.c.l.b16 %v52
  %v189 = vunpack.c.l.b16 %v53
  %v190 = vunpack.c.l.b16 %v54
  %v191 = vunpack.c.l.b16 %v55
  %v192 = vunpack.c.l.b16 %v56
  %v193 = vunpack.c.l.b16 %v57
  %v194 = vunpack.c.l.b16 %v58
  %v195 = vunpack.c.l.b16 %v59
  %v196 = vunpack.c.l.b16 %v60
  %v197 = vunpack.c.l.b16 %v61
  %v198 = vpack.c.b16 %v167, %v166
  %v199 = vpack.c.b16 %v169, %v168
  %v200 = vpack.c.b16 %v171, %v170
  %v201 = vpack.c.b16 %v173, %v172
  %v202 = vpack.c.b16 %v175, %v174
  %v203 = vpack.c.b16 %v177, %v176
  %v204 = vpack.c.b16 %v179, %v178
  %v205 = vpack.c.b16 %v181, %v180
  %v206 = vpack.c.b16 %v183, %v182
  %v207 = vpack.c.b16 %v185, %v184
  %v208 = vpack.c.b16 %v187, %v186
  %v209 = vpack.c.b16 %v189, %v188
  %v210 = vpack.c.b16 %v191, %v190
  %v211 = vpack.c.b16 %v193, %v192
  %v212 = vpack.c.b16 %v195, %v194
  %v213 = vpack.c.b16 %v197, %v196
  %vm229 = vcmask 998400
  %v231 = vsel %vm229, %v111, 0
  %v234 = vsel %vm229, %v113, 0
  %v237 = vsel %vm229, %v115, 0
  %v240 = vsel %vm229, %v117, 0
  %v243 = vsel %vm229, %v119, 0
  %v246 = vsel %vm229, %v121, 0
  %v249 = vsel %vm229, %v123, 0
  %v252 = vsel %vm229, %v125, 0
  %vm254 = vcmask 1044480
  %v256 = vsel %vm254, %v213, 0
  %258 = vmatpush.bf16.msra.mxu0 %v205
  %259 = vmatpush.bf16.msra.mxu0 %v204
  %260 = vmatpush.bf16.msra.mxu0 %v203
  %261 = vmatpush.bf16.msra.mxu0 %v202
  %262 = vmatpush.bf16.msra.mxu0 %v201
  %263 = vmatpush.bf16.msra.mxu0 %v200
  %264 = vmatpush.bf16.msra.mxu0 %v199
  %265 = vmatpush.bf16.msra.mxu0 %v198
  %266 = vmatmul.bf16.gmra.mxu0 %v110
  %v267 = vpop.f32.mrf.mxu0
  %v268 = vadd.f32 0.0, %v267
  %v269 = vpop.f32.mrf.mxu0
  %v270 = vadd.f32 0.0, %v269
  %271 = vmatmul.bf16.gmra.mxu0 %v112
  %v272 = vpop.f32.mrf.mxu0
  %v273 = vadd.f32 0.0, %v272
  %v274 = vpop.f32.mrf.mxu0
  %v275 = vadd.f32 0.0, %v274
  %276 = vmatmul.bf16.gmra.mxu0 %v114
  %v277 = vpop.f32.mrf.mxu0
  %v278 = vadd.f32 0.0, %v277
  %v279 = vpop.f32.mrf.mxu0
  %v280 = vadd.f32 0.0, %v279
  %281 = vmatmul.bf16.gmra.mxu0 %v116
  %v282 = vpop.f32.mrf.mxu0
  %v283 = vadd.f32 0.0, %v282
  %v284 = vpop.f32.mrf.mxu0
  %v285 = vadd.f32 0.0, %v284
  %286 = vmatmul.bf16.gmra.mxu0 %v118
  %v287 = vpop.f32.mrf.mxu0
  %v288 = vadd.f32 0.0, %v287
  %v289 = vpop.f32.mrf.mxu0
  %v290 = vadd.f32 0.0, %v289
  %291 = vmatmul.bf16.gmra.mxu0 %v120
  %v292 = vpop.f32.mrf.mxu0
  %v293 = vadd.f32 0.0, %v292
  %v294 = vpop.f32.mrf.mxu0
  %v295 = vadd.f32 0.0, %v294
  %296 = vmatmul.bf16.gmra.mxu0 %v122
  %v297 = vpop.f32.mrf.mxu0
  %v298 = vadd.f32 0.0, %v297
  %v299 = vpop.f32.mrf.mxu0
  %v300 = vadd.f32 0.0, %v299
  %301 = vmatmul.bf16.gmra.mxu0 %v124
  %v302 = vpop.f32.mrf.mxu0
  %v303 = vadd.f32 0.0, %v302
  %v304 = vpop.f32.mrf.mxu0
  %v305 = vadd.f32 0.0, %v304
  %306 = vdwg.mxu0
  %307 = vmatpush.bf16.msra.mxu0 %v256
  %308 = vmatpush.bf16.msra.mxu0 %v212
  %309 = vmatpush.bf16.msra.mxu0 %v211
  %310 = vmatpush.bf16.msra.mxu0 %v210
  %311 = vmatpush.bf16.msra.mxu0 %v209
  %312 = vmatpush.bf16.msra.mxu0 %v208
  %313 = vmatpush.bf16.msra.mxu0 %v207
  %314 = vmatpush.bf16.msra.mxu0 %v206
  %315 = vmatmul.bf16.gmra.mxu0 %v231
  %v316 = vpop.f32.mrf.mxu0
  %v317 = vadd.f32 %v268, %v316
  %v318 = vpop.f32.mrf.mxu0
  %v319 = vadd.f32 %v270, %v318
  %320 = vmatmul.bf16.gmra.mxu0 %v234
  %v321 = vpop.f32.mrf.mxu0
  %v322 = vadd.f32 %v273, %v321
  %v323 = vpop.f32.mrf.mxu0
  %v324 = vadd.f32 %v275, %v323
  %325 = vmatmul.bf16.gmra.mxu0 %v237
  %v326 = vpop.f32.mrf.mxu0
  %v327 = vadd.f32 %v278, %v326
  %v328 = vpop.f32.mrf.mxu0
  %v329 = vadd.f32 %v280, %v328
  %330 = vmatmul.bf16.gmra.mxu0 %v240
  %v331 = vpop.f32.mrf.mxu0
  %v332 = vadd.f32 %v283, %v331
  %v333 = vpop.f32.mrf.mxu0
  %v334 = vadd.f32 %v285, %v333
  %335 = vmatmul.bf16.gmra.mxu0 %v243
  %v336 = vpop.f32.mrf.mxu0
  %v337 = vadd.f32 %v288, %v336
  %v338 = vpop.f32.mrf.mxu0
  %v339 = vadd.f32 %v290, %v338
  %340 = vmatmul.bf16.gmra.mxu0 %v246
  %v341 = vpop.f32.mrf.mxu0
  %v342 = vadd.f32 %v293, %v341
  %v343 = vpop.f32.mrf.mxu0
  %v344 = vadd.f32 %v295, %v343
  %345 = vmatmul.bf16.gmra.mxu0 %v249
  %v346 = vpop.f32.mrf.mxu0
  %v347 = vadd.f32 %v298, %v346
  %v348 = vpop.f32.mrf.mxu0
  %v349 = vadd.f32 %v300, %v348
  %350 = vmatmul.bf16.gmra.mxu0 %v252
  %v351 = vpop.f32.mrf.mxu0
  %v352 = vadd.f32 %v303, %v351
  %v353 = vpop.f32.mrf.mxu0
  %v354 = vadd.f32 %v305, %v353
  %355 = vdwg.mxu0
  %v356 = vmax.f32 %v317, %v327
  %v357 = vmax.f32 %v319, %v329
  %v358 = vmax.f32 %v322, %v332
  %v359 = vmax.f32 %v324, %v334
  %v360 = vmax.f32 %v337, %v347
  %v361 = vmax.f32 %v339, %v349
  %v362 = vmax.f32 %v342, %v352
  %v363 = vmax.f32 %v344, %v354
  %v364 = vmax.f32 %v356, %v360
  %v365 = vmax.f32 %v357, %v361
  %v366 = vmax.f32 %v358, %v362
  %v367 = vmax.f32 %v359, %v363
  %v368 = vld [vmem:[%s2] sm:$0x1]
  %v370 = vperm.slane %v368, 0
  %v372 = vadd.f32 %v364, %v370
  %v373 = vadd.f32 %v365, %v370
  %v374 = vadd.f32 %v366, %v370
  %v375 = vadd.f32 %v367, %v370
  %v376 = vmax.f32 %v372, 0.0
  %v377 = vmax.f32 %v373, 0.0
  %v378 = vmax.f32 %v374, 0.0
  %v379 = vmax.f32 %v375, 0.0
  %v380 = vpack.c.bf16 %v376, %v376
  %v381 = vpack.c.bf16 %v377, %v377
  %v382 = vpack.c.bf16 %v378, %v378
  %v383 = vpack.c.bf16 %v379, %v379
  %384 = vst [vmem:[%s3] sm:$0xf] %v380
  %385 = vst [vmem:[%s3 + $0x4] sm:$0xf] %v381
  %386 = vst [vmem:[%s3 + $0x8] sm:$0xf] %v382
  %387 = vst [vmem:[%s3 + $0xc] sm:$0xf] %v383
  // Predicated region
  $region14: #{net1_forward.4} parent=0 // pred_check
    _
  $region15: #{net1_forward.4} parent=0 // pred_check_branch
    %389 = sbr.rel (0) target = $region17
  $region16: #{net1_forward.4} parent=0 // pred_region
    _
  $region17: #{net1_forward.4} parent=0 // pred_fallthru
    _
  // Predicated region
  $region18: #{net1_forward.4} parent=0 // pred_check
    _
  $region19: #{net1_forward.4} parent=0 // pred_check_branch
    %391 = sbr.rel (0) target = $region21
  $region20: #{net1_forward.4} parent=0 // pred_region
    _
  $region21: #{net1_forward.4} parent=0 // pred_fallthru
    _

// kernel: net1_forward.5
$region0: #{net1_forward.5}
  #allocation0 [shape = 'u32[]', space=smem, size = 0x4, offset = 0x4, fixed_abs, tag = 'smem constant byte address 0x4 - core index']
  #allocation1 [shape = 'u32[72,128]{1,0:T(1,128)}', space=vmem, size = 0x9000, scoped, tag = 'internal scratch']
  %s0 = inlined_call_operand.vmem [shape: bf16[16,320], index: 0, kind: input, shape index: {}]
  %s1 = inlined_call_operand.vmem [shape: bf16[320,128], index: 1, kind: input, shape index: {}]
  %s2 = inlined_call_operand.vmem [shape: f32[1,128], index: 2, kind: input, shape index: {}]
  %s3 = inlined_call_operand.vmem [shape: bf16[128,128], index: 3, kind: input, shape index: {}]
  %s4 = inlined_call_operand.vmem [shape: f32[1,128], index: 4, kind: input, shape index: {}]
  %s5 = inlined_call_operand.vmem [shape: f32[16,128], index: 5, kind: output, shape index: {0}]
  %s6 = inlined_call_operand.vmem [shape: f32[16,128], index: 6, kind: output, shape index: {1}]
  %7 = xla_tuple %s5, %s6
  %s8 = sld [smem:[#allocation0]]
  $region38: #{net1_forward.5} parent=0
    _
  %s10 = ssub.s32 1, %s8
  %s11 = scalar_select 0, %s10, %s8
  // Predicated region
  $region2: #{net1_forward.5} parent=0 // pred_check
    _
  $region3: #{net1_forward.5} parent=0 // pred_check_branch
    %13 = sbr.rel (0) target = $region5
  $region4: #{net1_forward.5} parent=0 // pred_region
    _
  $region5: #{net1_forward.5} parent=0 // pred_fallthru
    _
  // Predicated region
  $region6: #{net1_forward.5} parent=0 // pred_check
    _
  $region7: #{net1_forward.5} parent=0 // pred_check_branch
    %15 = sbr.rel (0) target = $region9
  $region8: #{net1_forward.5} parent=0 // pred_region
    _
  $region9: #{net1_forward.5} parent=0 // pred_fallthru
    _
  // Predicated region
  $region10: #{net1_forward.5} parent=0 // pred_check
    _
  $region11: #{net1_forward.5} parent=0 // pred_check_branch
    %17 = sbr.rel (0) target = $region13
  $region12: #{net1_forward.5} parent=0 // pred_region
    _
  $region13: #{net1_forward.5} parent=0 // pred_fallthru
    _
  // Predicated region
  $region14: #{net1_forward.5} parent=0 // pred_check
    _
  $region15: #{net1_forward.5} parent=0 // pred_check_branch
    %19 = sbr.rel (0) target = $region17
  $region16: #{net1_forward.5} parent=0 // pred_region
    _
  $region17: #{net1_forward.5} parent=0 // pred_fallthru
    _
  // Predicated region
  $region18: #{net1_forward.5} parent=0 // pred_check
    _
  $region19: #{net1_forward.5} parent=0 // pred_check_branch
    %21 = sbr.rel (0) target = $region21
  $region20: #{net1_forward.5} parent=0 // pred_region
    _
  $region21: #{net1_forward.5} parent=0 // pred_fallthru
    _
  %v23 = vld [vmem:[%s0] sm:$0xff]
  %v24 = vld [vmem:[%s0 + $0x8] sm:$0xf]
  %v25 = vld [vmem:[%s0 + $0xc] sm:$0xff]
  %v26 = vld [vmem:[%s0 + $0x14] sm:$0xf]
  %v27 = vld [vmem:[%s1] sm:$0xf]
  %v28 = vld [vmem:[%s1 + $0x4] sm:$0xf]
  %v29 = vld [vmem:[%s1 + $0x8] sm:$0xf]
  %v30 = vld [vmem:[%s1 + $0xc] sm:$0xf]
  %v31 = vld [vmem:[%s1 + $0x10] sm:$0xf]
  %v32 = vld [vmem:[%s1 + $0x14] sm:$0xf]
  %v33 = vld [vmem:[%s1 + $0x18] sm:$0xf]
  %v34 = vld [vmem:[%s1 + $0x1c] sm:$0xf]
  %v35 = vld [vmem:[%s1 + $0x20] sm:$0xf]
  %v36 = vld [vmem:[%s1 + $0x24] sm:$0xf]
  %v37 = vld [vmem:[%s1 + $0x28] sm:$0xf]
  %v38 = vld [vmem:[%s1 + $0x2c] sm:$0xf]
  %v39 = vld [vmem:[%s1 + $0x30] sm:$0xf]
  %v40 = vld [vmem:[%s1 + $0x34] sm:$0xf]
  %v41 = vld [vmem:[%s1 + $0x38] sm:$0xf]
  %v42 = vld [vmem:[%s1 + $0x3c] sm:$0xf]
  %v43 = vld [vmem:[%s1 + $0x40] sm:$0xf]
  %v44 = vld [vmem:[%s1 + $0x44] sm:$0xf]
  %v45 = vld [vmem:[%s1 + $0x48] sm:$0xf]
  %v46 = vld [vmem:[%s1 + $0x4c] sm:$0xf]
  %v47 = vld [vmem:[%s1 + $0x50] sm:$0xf]
  %v48 = vld [vmem:[%s1 + $0x54] sm:$0xf]
  %v49 = vld [vmem:[%s1 + $0x58] sm:$0xf]
  %v50 = vld [vmem:[%s1 + $0x5c] sm:$0xf]
  %v51 = vld [vmem:[%s1 + $0x60] sm:$0xf]
  %v52 = vld [vmem:[%s1 + $0x64] sm:$0xf]
  %v53 = vld [vmem:[%s1 + $0x68] sm:$0xf]
  %v54 = vld [vmem:[%s1 + $0x6c] sm:$0xf]
  %v55 = vld [vmem:[%s1 + $0x70] sm:$0xf]
  %v56 = vld [vmem:[%s1 + $0x74] sm:$0xf]
  %v57 = vld [vmem:[%s1 + $0x78] sm:$0xf]
  %v58 = vld [vmem:[%s1 + $0x7c] sm:$0xf]
  %v59 = vld [vmem:[%s1 + $0x80] sm:$0xf]
  %v60 = vld [vmem:[%s1 + $0x84] sm:$0xf]
  %v61 = vld [vmem:[%s1 + $0x88] sm:$0xf]
  %v62 = vld [vmem:[%s1 + $0x8c] sm:$0xf]
  %v63 = vld [vmem:[%s1 + $0x90] sm:$0xf]
  %v64 = vld [vmem:[%s1 + $0x94] sm:$0xf]
  %v65 = vld [vmem:[%s1 + $0x98] sm:$0xf]
  %v66 = vld [vmem:[%s1 + $0x9c] sm:$0xf]
  %v67 = vld [vmem:[%s2] sm:$0x1]
  %v69 = vperm.slane %v67, 0
  %v75 = vunpack.c.l.b16 %v23
  %v76 = vunpack.c.h.b16 %v23
  %v77 = vunpack.c.l.b16 %v24
  %v78 = vunpack.c.l.b16 %v25
  %v79 = vunpack.c.h.b16 %v25
  %v80 = vunpack.c.l.b16 %v26
  %v81 = vpack.c.b16 %v78, %v75
  %v82 = vpack.c.b16 %v79, %v76
  %v83 = vpack.c.b16 %v80, %v77
  %v126 = vunpack.c.l.b16 %v27
  %v127 = vunpack.c.l.b16 %v28
  %v128 = vunpack.c.l.b16 %v29
  %v129 = vunpack.c.l.b16 %v30
  %v130 = vunpack.c.l.b16 %v31
  %v131 = vunpack.c.l.b16 %v32
  %v132 = vunpack.c.l.b16 %v33
  %v133 = vunpack.c.l.b16 %v34
  %v134 = vunpack.c.l.b16 %v35
  %v135 = vunpack.c.l.b16 %v36
  %v136 = vunpack.c.l.b16 %v37
  %v137 = vunpack.c.l.b16 %v38
  %v138 = vunpack.c.l.b16 %v39
  %v139 = vunpack.c.l.b16 %v40
  %v140 = vunpack.c.l.b16 %v41
  %v141 = vunpack.c.l.b16 %v42
  %v142 = vunpack.c.l.b16 %v43
  %v143 = vunpack.c.l.b16 %v44
  %v144 = vunpack.c.l.b16 %v45
  %v145 = vunpack.c.l.b16 %v46
  %v146 = vunpack.c.l.b16 %v47
  %v147 = vunpack.c.l.b16 %v48
  %v148 = vunpack.c.l.b16 %v49
  %v149 = vunpack.c.l.b16 %v50
  %v150 = vunpack.c.l.b16 %v51
  %v151 = vunpack.c.l.b16 %v52
  %v152 = vunpack.c.l.b16 %v53
  %v153 = vunpack.c.l.b16 %v54
  %v154 = vunpack.c.l.b16 %v55
  %v155 = vunpack.c.l.b16 %v56
  %v156 = vunpack.c.l.b16 %v57
  %v157 = vunpack.c.l.b16 %v58
  %v158 = vunpack.c.l.b16 %v59
  %v159 = vunpack.c.l.b16 %v60
  %v160 = vunpack.c.l.b16 %v61
  %v161 = vunpack.c.l.b16 %v62
  %v162 = vunpack.c.l.b16 %v63
  %v163 = vunpack.c.l.b16 %v64
  %v164 = vunpack.c.l.b16 %v65
  %v165 = vunpack.c.l.b16 %v66
  %v166 = vpack.c.b16 %v127, %v126
  %v167 = vpack.c.b16 %v129, %v128
  %v168 = vpack.c.b16 %v131, %v130
  %v169 = vpack.c.b16 %v133, %v132
  %v170 = vpack.c.b16 %v135, %v134
  %v171 = vpack.c.b16 %v137, %v136
  %v172 = vpack.c.b16 %v139, %v138
  %v173 = vpack.c.b16 %v141, %v140
  %v174 = vpack.c.b16 %v143, %v142
  %v175 = vpack.c.b16 %v145, %v144
  %v176 = vpack.c.b16 %v147, %v146
  %v177 = vpack.c.b16 %v149, %v148
  %v178 = vpack.c.b16 %v151, %v150
  %v179 = vpack.c.b16 %v153, %v152
  %v180 = vpack.c.b16 %v155, %v154
  %v181 = vpack.c.b16 %v157, %v156
  %v182 = vpack.c.b16 %v159, %v158
  %v183 = vpack.c.b16 %v161, %v160
  %v184 = vpack.c.b16 %v163, %v162
  %v185 = vpack.c.b16 %v165, %v164
  %vm206 = vcmask 523264
  %v208 = vsel %vm206, %v83, 0
  %210 = vmatpush.bf16.msra.mxu0 %v173
  %211 = vmatpush.bf16.msra.mxu0 %v172
  %212 = vmatpush.bf16.msra.mxu0 %v171
  %213 = vmatpush.bf16.msra.mxu0 %v170
  %214 = vmatpush.bf16.msra.mxu0 %v169
  %215 = vmatpush.bf16.msra.mxu0 %v168
  %216 = vmatpush.bf16.msra.mxu0 %v167
  %217 = vmatpush.bf16.msra.mxu0 %v166
  %218 = vmatmul.bf16.gmra.mxu0 %v81
  %v219 = vpop.f32.mrf.mxu0
  %v220 = vadd.f32 %v69, %v219
  %v221 = vpop.f32.mrf.mxu0
  %v222 = vadd.f32 %v69, %v221
  %223 = vdwg.mxu0
  %224 = vmatpush.bf16.msra.mxu0 %v181
  %225 = vmatpush.bf16.msra.mxu0 %v180
  %226 = vmatpush.bf16.msra.mxu0 %v179
  %227 = vmatpush.bf16.msra.mxu0 %v178
  %228 = vmatpush.bf16.msra.mxu0 %v177
  %229 = vmatpush.bf16.msra.mxu0 %v176
  %230 = vmatpush.bf16.msra.mxu0 %v175
  %231 = vmatpush.bf16.msra.mxu0 %v174
  %232 = vmatmul.bf16.gmra.mxu0 %v82
  %v233 = vpop.f32.mrf.mxu0
  %v234 = vadd.f32 %v220, %v233
  %v235 = vpop.f32.mrf.mxu0
  %v236 = vadd.f32 %v222, %v235
  %237 = vdwg.mxu0
  %238 = vmatpush.bf16.msra.mxu0 0
  %239 = vmatpush.bf16.msra.mxu0 0
  %240 = vmatpush.bf16.msra.mxu0 0
  %241 = vmatpush.bf16.msra.mxu0 0
  %242 = vmatpush.bf16.msra.mxu0 %v185
  %243 = vmatpush.bf16.msra.mxu0 %v184
  %244 = vmatpush.bf16.msra.mxu0 %v183
  %245 = vmatpush.bf16.msra.mxu0 %v182
  %246 = vmatmul.bf16.gmra.mxu0 %v208
  %v247 = vpop.f32.mrf.mxu0
  %v248 = vadd.f32 %v234, %v247
  %v249 = vpop.f32.mrf.mxu0
  %v250 = vadd.f32 %v236, %v249
  %251 = vdwg.mxu0
  %v252 = vmax.f32 %v248, 0.0
  %v253 = vmax.f32 %v250, 0.0
  %254 = vst [vmem:[%s6] sm:$0xff] %v252
  %255 = vst [vmem:[%s6 + $0x8] sm:$0xff] %v253
  %v256 = vpack.c.bf16 %v253, %v252
  %v257 = vld [vmem:[%s3] sm:$0xf]
  %v258 = vld [vmem:[%s3 + $0x4] sm:$0xf]
  %v259 = vld [vmem:[%s3 + $0x8] sm:$0xf]
  %v260 = vld [vmem:[%s3 + $0xc] sm:$0xf]
  %v261 = vld [vmem:[%s3 + $0x10] sm:$0xf]
  %v262 = vld [vmem:[%s3 + $0x14] sm:$0xf]
  %v263 = vld [vmem:[%s3 + $0x18] sm:$0xf]
  %v264 = vld [vmem:[%s3 + $0x1c] sm:$0xf]
  %v265 = vld [vmem:[%s3 + $0x20] sm:$0xf]
  %v266 = vld [vmem:[%s3 + $0x24] sm:$0xf]
  %v267 = vld [vmem:[%s3 + $0x28] sm:$0xf]
  %v268 = vld [vmem:[%s3 + $0x2c] sm:$0xf]
  %v269 = vld [vmem:[%s3 + $0x30] sm:$0xf]
  %v270 = vld [vmem:[%s3 + $0x34] sm:$0xf]
  %v271 = vld [vmem:[%s3 + $0x38] sm:$0xf]
  %v272 = vld [vmem:[%s3 + $0x3c] sm:$0xf]
  %v273 = vld [vmem:[%s4] sm:$0x1]
  %v275 = vperm.slane %v273, 0
  %v293 = vunpack.c.l.b16 %v257
  %v294 = vunpack.c.l.b16 %v258
  %v295 = vunpack.c.l.b16 %v259
  %v296 = vunpack.c.l.b16 %v260
  %v297 = vunpack.c.l.b16 %v261
  %v298 = vunpack.c.l.b16 %v262
  %v299 = vunpack.c.l.b16 %v263
  %v300 = vunpack.c.l.b16 %v264
  %v301 = vunpack.c.l.b16 %v265
  %v302 = vunpack.c.l.b16 %v266
  %v303 = vunpack.c.l.b16 %v267
  %v304 = vunpack.c.l.b16 %v268
  %v305 = vunpack.c.l.b16 %v269
  %v306 = vunpack.c.l.b16 %v270
  %v307 = vunpack.c.l.b16 %v271
  %v308 = vunpack.c.l.b16 %v272
  %v309 = vpack.c.b16 %v294, %v293
  %v310 = vpack.c.b16 %v296, %v295
  %v311 = vpack.c.b16 %v298, %v297
  %v312 = vpack.c.b16 %v300, %v299
  %v313 = vpack.c.b16 %v302, %v301
  %v314 = vpack.c.b16 %v304, %v303
  %v315 = vpack.c.b16 %v306, %v305
  %v316 = vpack.c.b16 %v308, %v307
  %325 = vmatpush.bf16.msra.mxu0 %v316
  %326 = vmatpush.bf16.msra.mxu0 %v315
  %327 = vmatpush.bf16.msra.mxu0 %v314
  %328 = vmatpush.bf16.msra.mxu0 %v313
  %329 = vmatpush.bf16.msra.mxu0 %v312
  %330 = vmatpush.bf16.msra.mxu0 %v311
  %331 = vmatpush.bf16.msra.mxu0 %v310
  %332 = vmatpush.bf16.msra.mxu0 %v309
  %333 = vmatmul.bf16.gmra.mxu0 %v256
  %v334 = vpop.f32.mrf.mxu0
  %v335 = vadd.f32 %v275, %v334
  %v336 = vpop.f32.mrf.mxu0
  %v337 = vadd.f32 %v275, %v336
  %338 = vdwg.mxu0
  %339 = vst [vmem:[%s5] sm:$0xff] %v335
  %340 = vst [vmem:[%s5 + $0x8] sm:$0xff] %v337
  // Predicated region
  $region22: #{net1_forward.5} parent=0 // pred_check
    _
  $region23: #{net1_forward.5} parent=0 // pred_check_branch
    %342 = sbr.rel (0) target = $region25
  $region24: #{net1_forward.5} parent=0 // pred_region
    _
  $region25: #{net1_forward.5} parent=0 // pred_fallthru
    _
  // Predicated region
  $region26: #{net1_forward.5} parent=0 // pred_check
    _
  $region27: #{net1_forward.5} parent=0 // pred_check_branch
    %344 = sbr.rel (0) target = $region29
  $region28: #{net1_forward.5} parent=0 // pred_region
    _
  $region29: #{net1_forward.5} parent=0 // pred_fallthru
    _
  // Predicated region
  $region30: #{net1_forward.5} parent=0 // pred_check
    _
  $region31: #{net1_forward.5} parent=0 // pred_check_branch
    %346 = sbr.rel (0) target = $region33
  $region32: #{net1_forward.5} parent=0 // pred_region
    _
  $region33: #{net1_forward.5} parent=0 // pred_fallthru
    _
  // Predicated region
  $region34: #{net1_forward.5} parent=0 // pred_check
    _
  $region35: #{net1_forward.5} parent=0 // pred_check_branch
    %348 = sbr.rel (0) target = $region37
  $region36: #{net1_forward.5} parent=0 // pred_region
    _
  $region37: #{net1_forward.5} parent=0 // pred_fallthru
    _

</llo_original>
